<compile_context>
chip_gen: v7x
topology: tpu7x:2x2x1
jax: 0.10.0
libtpu: 0.0.40
codegen_flags: <defaults>
</compile_context>

<pallas_src>
import jax
import jax.numpy as jnp
import numpy as np
from jax.experimental import pallas as pl
from jax.experimental.pallas import tpu as pltpu


# ----------------------------------------------------------------------------
# Weight / interpolation matrix preparation (hoisted out of the jitted forward)
# ----------------------------------------------------------------------------
def conv_lane_matrix(w, W):
    """(3,3,Cin,Cout) conv weight -> (3, W*Cin, W*Cout) banded lane matrices.

    With a row slab whose lane index is x*Cin + ci, the 3x3 conv (padding=1)
    output at slab row r is  sum_dy  slab[r + dy - 1] @ M[dy]; horizontal taps
    and horizontal zero padding are baked into M."""
    _, _, Cin, Cout = w.shape
    taps = np.zeros((3, W, W), np.float32)        # taps[dx, xs, x]=1 iff xs==x+dx-1
    for dx in range(3):
        for x in range(W):
            xs = x + dx - 1
            if 0 <= xs < W:
                taps[dx, xs, x] = 1.0
    m5 = jnp.einsum("dsx,edio->esixo", jnp.asarray(taps), w)   # (dy, xs, ci, x, co)
    return m5.reshape(3, W * Cin, W * Cout)


def prepare_refine_params(params, W):
    """Run ONCE per weight update, OUTSIDE jit: builds the K-stacked banded
    conv matrices (bf16) and lane-tiled biases (f32) used by the fused kernel."""
    def stacked(w):
        m3 = conv_lane_matrix(w, W)
        _, wci, wco = m3.shape
        return m3.reshape(3 * wci, wco).astype(jnp.bfloat16)

    mc = stacked(params["conv_w"])
    mr = jnp.stack([stacked(params["res1"]["w1"]), stacked(params["res1"]["w2"]),
                    stacked(params["res2"]["w1"]), stacked(params["res2"]["w2"])])
    bias = jnp.stack([jnp.tile(params["conv_b"], W),
                      jnp.tile(params["res1"]["b1"], W),
                      jnp.tile(params["res1"]["b2"], W),
                      jnp.tile(params["res2"]["b1"], W),
                      jnp.tile(params["res2"]["b2"], W)]).astype(jnp.float32)
    return {"mc": mc, "mr": mr, "bias": bias}


def bilinear_matrix(out_size, in_size):
    """PyTorch F.interpolate(mode='bilinear', align_corners=False) weights."""
    scale = in_size / out_size
    M = np.zeros((out_size, in_size), np.float32)
    for o in range(out_size):
        src = (o + 0.5) * scale - 0.5
        src = max(src, 0.0)
        i0 = min(int(np.floor(src)), in_size - 1)
        i1 = min(i0 + 1, in_size - 1)
        lam = src - i0
        M[o, i0] += 1.0 - lam
        M[o, i1] += lam
    return M


def _choose_bn(N, H, target_rows=256):
    """Batch-fold factor: stack Bn samples per grid step so the matmul M dim
    is ~target_rows, while keeping >= 2 grid steps when N allows (v7x: 2 TCs)."""
    max_bn = max(1, target_rows // (H + 2))
    divisors = [d for d in range(1, N + 1) if N % d == 0]
    cand = [d for d in divisors if d <= max_bn and (N // d) >= 2]
    if not cand:
        cand = [d for d in divisors if d <= max_bn] or [1]
    return max(cand)


# ----------------------------------------------------------------------------
# Fused Refine kernel
# ----------------------------------------------------------------------------
def _make_refine_kernel(H, Bn, WCi):
    R = Bn * (H + 2)
    f32, bf16 = jnp.float32, jnp.bfloat16

    def conv_stacked(v, mstack, bias_row):
        # v: (R, WC) f32 slab with zeros at the per-sample padding rows.
        # One MXU matmul: the 3 kernel-row taps sit side by side along lanes.
        zrow = jnp.zeros((1, v.shape[1]), f32)
        down = jnp.concatenate([zrow, v[:-1, :]], axis=0)   # row r -> v[r-1]
        up = jnp.concatenate([v[1:, :], zrow], axis=0)      # row r -> v[r+1]
        s3 = jnp.concatenate([down, v, up], axis=1).astype(bf16)   # (R, 3*WC)
        acc = jnp.dot(s3, mstack, preferred_element_type=f32)
        return acc + bias_row                                # (R, WCo) f32

    def kernel(high_ref, low_ref, mask_ref, mc_ref, mr_ref, b_ref, ar_ref,
               bk_ref, out_ref):
        mask = mask_ref[...]                                 # (R, 1) f32 0/1

        # Stack Bn samples into one slab with a zero row above/below each.
        xh = high_ref[...].astype(f32)                       # (Bn*H, WCi)
        zrow = jnp.zeros((1, WCi), f32)
        pieces = []
        for b in range(Bn):
            pieces += [zrow, xh[b * H:(b + 1) * H, :], zrow]
        x = jnp.concatenate(pieces, axis=0)                  # (R, WCi)

        def staged(y):      # relu + re-zero padding rows, one fused VPU pass
            return jnp.maximum(y, 0.0) * mask

        # Entry conv:  f = conv(high) + b0
        f = conv_stacked(x, mc_ref[...], b_ref[0:1, :])

        # ResBlock 1:  s = f + conv2(relu(conv1(relu(f))))
        r = conv_stacked(staged(f), mr_ref[0], b_ref[1:2, :])
        r = conv_stacked(staged(r), mr_ref[1], b_ref[2:3, :])
        s = f + r

        # Bilinear x2 upsample of the low-level feature (batched matmuls):
        # block-diag row interp (zero rows at padding rows), then col interp.
        t = jnp.dot(ar_ref[...], low_ref[...], preferred_element_type=f32)
        up = jnp.dot(t.astype(bf16), bk_ref[...], preferred_element_type=f32)
        m = s + up

        # ResBlock 2:  out = m + conv2(relu(conv1(relu(m))))
        r = conv_stacked(staged(m), mr_ref[2], b_ref[3:4, :])
        r = conv_stacked(staged(r), mr_ref[3], b_ref[4:5, :])
        res = m + r                                          # (R, WCo) f32

        # Drop the per-sample padding rows when writing out (lane-dense store).
        for b in range(Bn):
            base = b * (H + 2)
            out_ref[b * H:(b + 1) * H, :] = res[base + 1: base + 1 + H, :]

    return kernel


def refine_forward(high_nchw, low_nchw, prep):
    """Fused Refine forward.  NCHW in/out (PyTorch convention); the Pallas
    kernel works on a lane-dense (rows, W*C) layout.  If adjacent layers also
    use the lane-dense layout, drop the NCHW transposes and call the kernel on
    the 2-D slabs directly."""
    N, Cin, H, W = high_nchw.shape
    _, Cout, H2, W2 = low_nchw.shape
    WCi, WCo, W2C = W * Cin, W * Cout, W2 * Cout

    # NCHW -> lane-dense 2-D slabs, bf16 (halves input DMA; MXU is bf16-native).
    high2d = jnp.transpose(high_nchw, (0, 2, 3, 1)).reshape(N * H, WCi)
    high2d = high2d.astype(jnp.bfloat16)
    low2d = jnp.transpose(low_nchw, (0, 2, 3, 1)).reshape(N * H2, W2C)
    low2d = low2d.astype(jnp.bfloat16)

    # Batch folding: Bn samples per grid step, >= 2 grid steps when possible.
    Bn = _choose_bn(N, H)
    R = Bn * (H + 2)

    # Trace-time numpy constants (interp weights 0.25/0.75/1.0 exact in bf16).
    A = bilinear_matrix(H, H2)                      # (H, H2)  row interp
    Bcol = bilinear_matrix(W, W2)                   # (W, W2)  col interp
    a_stack_np = np.zeros((R, Bn * H2), np.float32)
    mask_np = np.zeros((R, 1), np.float32)
    for b in range(Bn):
        base = b * (H + 2)
        a_stack_np[base + 1: base + 1 + H, b * H2:(b + 1) * H2] = A
        mask_np[base + 1: base + 1 + H, 0] = 1.0
    bk_np = np.kron(Bcol.T, np.eye(Cout, dtype=np.float32))   # (W2*C, W*C)

    a_stack = jnp.asarray(a_stack_np, jnp.bfloat16)
    bk = jnp.asarray(bk_np, jnp.bfloat16)
    row_mask = jnp.asarray(mask_np, jnp.float32)

    kernel = _make_refine_kernel(H, Bn, WCi)

    # TODO(synk): add W-tiling of the banded weights and single-buffered weight
    # BlockSpecs (pl.Buffered(1)) for very large W*C (VMEM scales as 3*W^2*C^2).
    out2d = pl.pallas_call(
        kernel,
        out_shape=jax.ShapeDtypeStruct((N * H, WCo), jnp.float32),
        grid=(N // Bn,),
        in_specs=[
            pl.BlockSpec((Bn * H, WCi), lambda n: (n, 0)),          # high slab
            pl.BlockSpec((Bn * H2, W2C), lambda n: (n, 0)),         # low slab
            pl.BlockSpec((R, 1), lambda n: (0, 0)),                 # row mask
            pl.BlockSpec((3 * WCi, WCo), lambda n: (0, 0)),         # entry conv W
            pl.BlockSpec((4, 3 * WCo, WCo), lambda n: (0, 0, 0)),   # res conv Ws
            pl.BlockSpec((5, WCo), lambda n: (0, 0)),               # biases
            pl.BlockSpec((R, Bn * H2), lambda n: (0, 0)),           # row interp
            pl.BlockSpec((W2C, WCo), lambda n: (0, 0)),             # col interp
        ],
        out_specs=pl.BlockSpec((Bn * H, WCo), lambda n: (n, 0)),
        compiler_params=pltpu.CompilerParams(
            dimension_semantics=("parallel",),
            vmem_limit_bytes=32 * 1024 * 1024),
    )(high2d, low2d, row_mask, prep["mc"], prep["mr"], prep["bias"],
      a_stack, bk)

    # lane-dense -> NCHW
    return jnp.transpose(out2d.reshape(N, H, W, Cout), (0, 3, 1, 2))


# ----------------------------------------------------------------------------
# Pure-JAX reference (NCHW, f32) for the correctness check
# ----------------------------------------------------------------------------
def conv_ref(x_nchw, w, b):
    w_oihw = jnp.transpose(w, (3, 2, 0, 1))  # HWIO -> OIHW
    y = jax.lax.conv_general_dilated(
        x_nchw, w_oihw, window_strides=(1, 1), padding=((1, 1), (1, 1)),
        dimension_numbers=("NCHW", "OIHW", "NCHW"))
    return y + b[None, :, None, None]


def res_block_ref(x, p):
    r = conv_ref(jax.nn.relu(x), p["w1"], p["b1"])
    r = conv_ref(jax.nn.relu(r), p["w2"], p["b2"])
    return x + r


def refine_ref(high_nchw, low_nchw, params):
    _, _, H, W = high_nchw.shape
    _, _, H2, W2 = low_nchw.shape
    A = jnp.asarray(bilinear_matrix(H, H2))
    B = jnp.asarray(bilinear_matrix(W, W2))
    f = conv_ref(high_nchw, params["conv_w"], params["conv_b"])
    s = res_block_ref(f, params["res1"])
    up = jnp.einsum("oh,nchw->ncow", A, low_nchw)
    up = jnp.einsum("pw,ncow->ncop", B, up)
    m = s + up
    return res_block_ref(m, params["res2"])


# ----------------------------------------------------------------------------
if __name__ == "__main__":
    N, in_c, out_c = 4, 4, 8
    H = W = 16            # high-level feature spatial size
    H2 = W2 = H // 2      # low-level feature spatial size (x2 upsample -> H, W)

    key = jax.random.PRNGKey(0)
    keys = jax.random.split(key, 12)

    def winit(k, cin, cout, scale=0.1):
        return scale * jax.random.normal(k, (3, 3, cin, cout), jnp.float32)

    def binit(k, cout, scale=0.05):
        return scale * jax.random.normal(k, (cout,), jnp.float32)

    params = {
        "conv_w": winit(keys[0], in_c, out_c),
        "conv_b": binit(keys[1], out_c),
        "res1": {
            "w1": winit(keys[2], out_c, out_c), "b1": binit(keys[3], out_c),
            "w2": winit(keys[4], out_c, out_c), "b2": binit(keys[5], out_c),
        },
        "res2": {
            "w1": winit(keys[6], out_c, out_c), "b1": binit(keys[7], out_c),
            "w2": winit(keys[8], out_c, out_c), "b2": binit(keys[9], out_c),
        },
    }

    # Inputs in PyTorch NCHW convention.
    high_nchw = jax.random.normal(keys[10], (N, in_c, H, W), jnp.float32)
    low_nchw = jax.random.normal(keys[11], (N, out_c, H2, W2), jnp.float32)

    # Banded weight matrices: built once, outside the jitted forward.
    prep = prepare_refine_params(params, W)

    run = jax.jit(refine_forward)
    out_nchw = jax.block_until_ready(run(high_nchw, low_nchw, prep))

    # Correctness check against a pure-JAX f32 NCHW reference (kernel is bf16
    # on the MXU with f32 accumulation).
    ref = refine_ref(high_nchw, low_nchw, params)
    assert out_nchw.shape == (N, out_c, H, W)
    np.testing.assert_allclose(np.asarray(out_nchw), np.asarray(ref),
                               rtol=3e-2, atol=3e-2)

    print("KERNEL_OK")
</pallas_src>

<mosaic_0001>
module attributes {stable_mosaic.version = 11 : i64} {
  func.func @kernel(%arg0: i32, %arg1: memref<32x64xbf16, #tpu.memory_space<vmem>>, %arg2: memref<16x64xbf16, #tpu.memory_space<vmem>>, %arg3: memref<36x1xf32, #tpu.memory_space<vmem>>, %arg4: memref<192x128xbf16, #tpu.memory_space<vmem>>, %arg5: memref<4x384x128xbf16, #tpu.memory_space<vmem>>, %arg6: memref<5x128xf32, #tpu.memory_space<vmem>>, %arg7: memref<36x16xbf16, #tpu.memory_space<vmem>>, %arg8: memref<64x128xbf16, #tpu.memory_space<vmem>>, %arg9: memref<32x128xf32, #tpu.memory_space<vmem>>) attributes {dimension_semantics = [#tpu.dimension_semantics<parallel>], iteration_bounds = array<i64: 2>, scalar_prefetch = 0 : i64, scratch_operands = 0 : i64, tpu.core_type = #tpu.core_type<tc>, window_params = [{transform_indices = @transform_0, window_bounds = array<i64: 32, 64>}, {transform_indices = @transform_1, window_bounds = array<i64: 16, 64>}, {pipeline_mode = #tpu.pipeline_mode<synchronous>, transform_indices = @transform_2, window_bounds = array<i64: 36, 1>}, {pipeline_mode = #tpu.pipeline_mode<synchronous>, transform_indices = @transform_3, window_bounds = array<i64: 192, 128>}, {pipeline_mode = #tpu.pipeline_mode<synchronous>, transform_indices = @transform_4, window_bounds = array<i64: 4, 384, 128>}, {pipeline_mode = #tpu.pipeline_mode<synchronous>, transform_indices = @transform_5, window_bounds = array<i64: 5, 128>}, {pipeline_mode = #tpu.pipeline_mode<synchronous>, transform_indices = @transform_6, window_bounds = array<i64: 36, 16>}, {pipeline_mode = #tpu.pipeline_mode<synchronous>, transform_indices = @transform_7, window_bounds = array<i64: 64, 128>}, {transform_indices = @transform_8, window_bounds = array<i64: 32, 128>}]} {
    %c0 = arith.constant 0 : index
    %c0_0 = arith.constant 0 : index
    %0 = vector.load %arg3[%c0, %c0_0] : memref<36x1xf32, #tpu.memory_space<vmem>>, vector<36x1xf32>
    %c0_1 = arith.constant 0 : index
    %c0_2 = arith.constant 0 : index
    %1 = vector.load %arg1[%c0_1, %c0_2] : memref<32x64xbf16, #tpu.memory_space<vmem>>, vector<32x64xbf16>
    %2 = arith.extf %1 : vector<32x64xbf16> to vector<32x64xf32>
    %cst = arith.constant 0.000000e+00 : f32
    %3 = vector.broadcast %cst : f32 to vector<1x64xf32>
    %4 = vector.extract_strided_slice %2 {offsets = [0, 0], sizes = [16, 64], strides = [1, 1]} : vector<32x64xf32> to vector<16x64xf32>
    %5 = vector.extract_strided_slice %2 {offsets = [16, 0], sizes = [16, 64], strides = [1, 1]} : vector<32x64xf32> to vector<16x64xf32>
    %6 = tpu.concatenate %3, %4, %3, %3, %5, %3 in 0 : vector<1x64xf32>, vector<16x64xf32>, vector<1x64xf32>, vector<1x64xf32>, vector<16x64xf32>, vector<1x64xf32> -> vector<36x64xf32>
    %c0_3 = arith.constant 0 : index
    %c0_4 = arith.constant 0 : index
    %7 = vector.load %arg4[%c0_3, %c0_4] : memref<192x128xbf16, #tpu.memory_space<vmem>>, vector<192x128xbf16>
    %c0_5 = arith.constant 0 : index
    %c0_6 = arith.constant 0 : index
    %8 = vector.load %arg6[%c0_5, %c0_6] : memref<5x128xf32, #tpu.memory_space<vmem>>, vector<1x128xf32>
    %cst_7 = arith.constant 0.000000e+00 : f32
    %9 = vector.broadcast %cst_7 : f32 to vector<1x64xf32>
    %10 = vector.extract_strided_slice %6 {offsets = [0, 0], sizes = [35, 64], strides = [1, 1]} : vector<36x64xf32> to vector<35x64xf32>
    %11 = tpu.concatenate %9, %10 in 0 : vector<1x64xf32>, vector<35x64xf32> -> vector<36x64xf32>
    %12 = vector.extract_strided_slice %6 {offsets = [1, 0], sizes = [35, 64], strides = [1, 1]} : vector<36x64xf32> to vector<35x64xf32>
    %13 = tpu.concatenate %12, %9 in 0 : vector<35x64xf32>, vector<1x64xf32> -> vector<36x64xf32>
    %14 = tpu.concatenate %11, %6, %13 in 1 : vector<36x64xf32>, vector<36x64xf32>, vector<36x64xf32> -> vector<36x192xf32>
    %15 = arith.truncf %14 : vector<36x192xf32> to vector<36x192xbf16>
    %cst_8 = arith.constant dense<0.000000e+00> : vector<36x128xf32>
    %16 = tpu.matmul %15, %7, %cst_8 {dimension_numbers = #tpu.dot_dimension_numbers<[1], [0], [0], [1], [0, 0, 1, 1], [], []>} : vector<36x192xbf16>, vector<192x128xbf16>, vector<36x128xf32> -> vector<36x128xf32>
    %17 = vector.broadcast %8 : vector<1x128xf32> to vector<36x128xf32>
    %18 = arith.addf %16, %17 : vector<36x128xf32>
    %cst_9 = arith.constant 0.000000e+00 : f32
    %19 = vector.broadcast %cst_9 : f32 to vector<36x128xf32>
    %20 = arith.maximumf %18, %19 : vector<36x128xf32>
    %21 = vector.broadcast %0 : vector<36x1xf32> to vector<36x128xf32>
    %22 = arith.mulf %20, %21 : vector<36x128xf32>
    %c0_10 = arith.constant 0 : index
    %c0_11 = arith.constant 0 : index
    %c0_12 = arith.constant 0 : index
    %23 = vector.load %arg5[%c0_10, %c0_11, %c0_12] : memref<4x384x128xbf16, #tpu.memory_space<vmem>>, vector<1x384x128xbf16>
    %24 = vector.shape_cast %23 : vector<1x384x128xbf16> to vector<384x128xbf16>
    %c1 = arith.constant 1 : index
    %c0_13 = arith.constant 0 : index
    %25 = vector.load %arg6[%c1, %c0_13] : memref<5x128xf32, #tpu.memory_space<vmem>>, vector<1x128xf32>
    %cst_14 = arith.constant 0.000000e+00 : f32
    %26 = vector.broadcast %cst_14 : f32 to vector<1x128xf32>
    %27 = vector.extract_strided_slice %22 {offsets = [0, 0], sizes = [35, 128], strides = [1, 1]} : vector<36x128xf32> to vector<35x128xf32>
    %28 = tpu.concatenate %26, %27 in 0 : vector<1x128xf32>, vector<35x128xf32> -> vector<36x128xf32>
    %29 = vector.extract_strided_slice %22 {offsets = [1, 0], sizes = [35, 128], strides = [1, 1]} : vector<36x128xf32> to vector<35x128xf32>
    %30 = tpu.concatenate %29, %26 in 0 : vector<35x128xf32>, vector<1x128xf32> -> vector<36x128xf32>
    %31 = tpu.concatenate %28, %22, %30 in 1 : vector<36x128xf32>, vector<36x128xf32>, vector<36x128xf32> -> vector<36x384xf32>
    %32 = arith.truncf %31 : vector<36x384xf32> to vector<36x384xbf16>
    %cst_15 = arith.constant dense<0.000000e+00> : vector<36x128xf32>
    %33 = tpu.matmul %32, %24, %cst_15 {dimension_numbers = #tpu.dot_dimension_numbers<[1], [0], [0], [1], [0, 0, 1, 1], [], []>} : vector<36x384xbf16>, vector<384x128xbf16>, vector<36x128xf32> -> vector<36x128xf32>
    %34 = vector.broadcast %25 : vector<1x128xf32> to vector<36x128xf32>
    %35 = arith.addf %33, %34 : vector<36x128xf32>
    %cst_16 = arith.constant 0.000000e+00 : f32
    %36 = vector.broadcast %cst_16 : f32 to vector<36x128xf32>
    %37 = arith.maximumf %35, %36 : vector<36x128xf32>
    %38 = vector.broadcast %0 : vector<36x1xf32> to vector<36x128xf32>
    %39 = arith.mulf %37, %38 : vector<36x128xf32>
    %c1_17 = arith.constant 1 : index
    %c0_18 = arith.constant 0 : index
    %c0_19 = arith.constant 0 : index
    %40 = vector.load %arg5[%c1_17, %c0_18, %c0_19] : memref<4x384x128xbf16, #tpu.memory_space<vmem>>, vector<1x384x128xbf16>
    %41 = vector.shape_cast %40 : vector<1x384x128xbf16> to vector<384x128xbf16>
    %c2 = arith.constant 2 : index
    %c0_20 = arith.constant 0 : index
    %42 = vector.load %arg6[%c2, %c0_20] : memref<5x128xf32, #tpu.memory_space<vmem>>, vector<1x128xf32>
    %cst_21 = arith.constant 0.000000e+00 : f32
    %43 = vector.broadcast %cst_21 : f32 to vector<1x128xf32>
    %44 = vector.extract_strided_slice %39 {offsets = [0, 0], sizes = [35, 128], strides = [1, 1]} : vector<36x128xf32> to vector<35x128xf32>
    %45 = tpu.concatenate %43, %44 in 0 : vector<1x128xf32>, vector<35x128xf32> -> vector<36x128xf32>
    %46 = vector.extract_strided_slice %39 {offsets = [1, 0], sizes = [35, 128], strides = [1, 1]} : vector<36x128xf32> to vector<35x128xf32>
    %47 = tpu.concatenate %46, %43 in 0 : vector<35x128xf32>, vector<1x128xf32> -> vector<36x128xf32>
    %48 = tpu.concatenate %45, %39, %47 in 1 : vector<36x128xf32>, vector<36x128xf32>, vector<36x128xf32> -> vector<36x384xf32>
    %49 = arith.truncf %48 : vector<36x384xf32> to vector<36x384xbf16>
    %cst_22 = arith.constant dense<0.000000e+00> : vector<36x128xf32>
    %50 = tpu.matmul %49, %41, %cst_22 {dimension_numbers = #tpu.dot_dimension_numbers<[1], [0], [0], [1], [0, 0, 1, 1], [], []>} : vector<36x384xbf16>, vector<384x128xbf16>, vector<36x128xf32> -> vector<36x128xf32>
    %51 = vector.broadcast %42 : vector<1x128xf32> to vector<36x128xf32>
    %52 = arith.addf %50, %51 : vector<36x128xf32>
    %53 = arith.addf %18, %52 : vector<36x128xf32>
    %c0_23 = arith.constant 0 : index
    %c0_24 = arith.constant 0 : index
    %54 = vector.load %arg7[%c0_23, %c0_24] : memref<36x16xbf16, #tpu.memory_space<vmem>>, vector<36x16xbf16>
    %c0_25 = arith.constant 0 : index
    %c0_26 = arith.constant 0 : index
    %55 = vector.load %arg2[%c0_25, %c0_26] : memref<16x64xbf16, #tpu.memory_space<vmem>>, vector<16x64xbf16>
    %cst_27 = arith.constant dense<0.000000e+00> : vector<36x64xf32>
    %56 = tpu.matmul %54, %55, %cst_27 {dimension_numbers = #tpu.dot_dimension_numbers<[1], [0], [0], [1], [0, 0, 1, 1], [], []>} : vector<36x16xbf16>, vector<16x64xbf16>, vector<36x64xf32> -> vector<36x64xf32>
    %57 = arith.truncf %56 : vector<36x64xf32> to vector<36x64xbf16>
    %c0_28 = arith.constant 0 : index
    %c0_29 = arith.constant 0 : index
    %58 = vector.load %arg8[%c0_28, %c0_29] : memref<64x128xbf16, #tpu.memory_space<vmem>>, vector<64x128xbf16>
    %cst_30 = arith.constant dense<0.000000e+00> : vector<36x128xf32>
    %59 = tpu.matmul %57, %58, %cst_30 {dimension_numbers = #tpu.dot_dimension_numbers<[1], [0], [0], [1], [0, 0, 1, 1], [], []>} : vector<36x64xbf16>, vector<64x128xbf16>, vector<36x128xf32> -> vector<36x128xf32>
    %60 = arith.addf %53, %59 : vector<36x128xf32>
    %cst_31 = arith.constant 0.000000e+00 : f32
    %61 = vector.broadcast %cst_31 : f32 to vector<36x128xf32>
    %62 = arith.maximumf %60, %61 : vector<36x128xf32>
    %63 = vector.broadcast %0 : vector<36x1xf32> to vector<36x128xf32>
    %64 = arith.mulf %62, %63 : vector<36x128xf32>
    %c2_32 = arith.constant 2 : index
    %c0_33 = arith.constant 0 : index
    %c0_34 = arith.constant 0 : index
    %65 = vector.load %arg5[%c2_32, %c0_33, %c0_34] : memref<4x384x128xbf16, #tpu.memory_space<vmem>>, vector<1x384x128xbf16>
    %66 = vector.shape_cast %65 : vector<1x384x128xbf16> to vector<384x128xbf16>
    %c3 = arith.constant 3 : index
    %c0_35 = arith.constant 0 : index
    %67 = vector.load %arg6[%c3, %c0_35] : memref<5x128xf32, #tpu.memory_space<vmem>>, vector<1x128xf32>
    %cst_36 = arith.constant 0.000000e+00 : f32
    %68 = vector.broadcast %cst_36 : f32 to vector<1x128xf32>
    %69 = vector.extract_strided_slice %64 {offsets = [0, 0], sizes = [35, 128], strides = [1, 1]} : vector<36x128xf32> to vector<35x128xf32>
    %70 = tpu.concatenate %68, %69 in 0 : vector<1x128xf32>, vector<35x128xf32> -> vector<36x128xf32>
    %71 = vector.extract_strided_slice %64 {offsets = [1, 0], sizes = [35, 128], strides = [1, 1]} : vector<36x128xf32> to vector<35x128xf32>
    %72 = tpu.concatenate %71, %68 in 0 : vector<35x128xf32>, vector<1x128xf32> -> vector<36x128xf32>
    %73 = tpu.concatenate %70, %64, %72 in 1 : vector<36x128xf32>, vector<36x128xf32>, vector<36x128xf32> -> vector<36x384xf32>
    %74 = arith.truncf %73 : vector<36x384xf32> to vector<36x384xbf16>
    %cst_37 = arith.constant dense<0.000000e+00> : vector<36x128xf32>
    %75 = tpu.matmul %74, %66, %cst_37 {dimension_numbers = #tpu.dot_dimension_numbers<[1], [0], [0], [1], [0, 0, 1, 1], [], []>} : vector<36x384xbf16>, vector<384x128xbf16>, vector<36x128xf32> -> vector<36x128xf32>
    %76 = vector.broadcast %67 : vector<1x128xf32> to vector<36x128xf32>
    %77 = arith.addf %75, %76 : vector<36x128xf32>
    %cst_38 = arith.constant 0.000000e+00 : f32
    %78 = vector.broadcast %cst_38 : f32 to vector<36x128xf32>
    %79 = arith.maximumf %77, %78 : vector<36x128xf32>
    %80 = vector.broadcast %0 : vector<36x1xf32> to vector<36x128xf32>
    %81 = arith.mulf %79, %80 : vector<36x128xf32>
    %c3_39 = arith.constant 3 : index
    %c0_40 = arith.constant 0 : index
    %c0_41 = arith.constant 0 : index
    %82 = vector.load %arg5[%c3_39, %c0_40, %c0_41] : memref<4x384x128xbf16, #tpu.memory_space<vmem>>, vector<1x384x128xbf16>
    %83 = vector.shape_cast %82 : vector<1x384x128xbf16> to vector<384x128xbf16>
    %c4 = arith.constant 4 : index
    %c0_42 = arith.constant 0 : index
    %84 = vector.load %arg6[%c4, %c0_42] : memref<5x128xf32, #tpu.memory_space<vmem>>, vector<1x128xf32>
    %cst_43 = arith.constant 0.000000e+00 : f32
    %85 = vector.broadcast %cst_43 : f32 to vector<1x128xf32>
    %86 = vector.extract_strided_slice %81 {offsets = [0, 0], sizes = [35, 128], strides = [1, 1]} : vector<36x128xf32> to vector<35x128xf32>
    %87 = tpu.concatenate %85, %86 in 0 : vector<1x128xf32>, vector<35x128xf32> -> vector<36x128xf32>
    %88 = vector.extract_strided_slice %81 {offsets = [1, 0], sizes = [35, 128], strides = [1, 1]} : vector<36x128xf32> to vector<35x128xf32>
    %89 = tpu.concatenate %88, %85 in 0 : vector<35x128xf32>, vector<1x128xf32> -> vector<36x128xf32>
    %90 = tpu.concatenate %87, %81, %89 in 1 : vector<36x128xf32>, vector<36x128xf32>, vector<36x128xf32> -> vector<36x384xf32>
    %91 = arith.truncf %90 : vector<36x384xf32> to vector<36x384xbf16>
    %cst_44 = arith.constant dense<0.000000e+00> : vector<36x128xf32>
    %92 = tpu.matmul %91, %83, %cst_44 {dimension_numbers = #tpu.dot_dimension_numbers<[1], [0], [0], [1], [0, 0, 1, 1], [], []>} : vector<36x384xbf16>, vector<384x128xbf16>, vector<36x128xf32> -> vector<36x128xf32>
    %93 = vector.broadcast %84 : vector<1x128xf32> to vector<36x128xf32>
    %94 = arith.addf %92, %93 : vector<36x128xf32>
    %95 = arith.addf %60, %94 : vector<36x128xf32>
    %96 = vector.extract_strided_slice %95 {offsets = [1, 0], sizes = [16, 128], strides = [1, 1]} : vector<36x128xf32> to vector<16x128xf32>
    %c0_45 = arith.constant 0 : index
    %c0_46 = arith.constant 0 : index
    %97 = vector.load %arg9[%c0_45, %c0_46] : memref<32x128xf32, #tpu.memory_space<vmem>>, vector<16x128xf32>
    tpu.vector_store %arg9[%c0_45, %c0_46], %96 {strides = array<i32>} : memref<32x128xf32, #tpu.memory_space<vmem>>, vector<16x128xf32>,
    %98 = vector.extract_strided_slice %95 {offsets = [19, 0], sizes = [16, 128], strides = [1, 1]} : vector<36x128xf32> to vector<16x128xf32>
    %c16 = arith.constant 16 : index
    %c0_47 = arith.constant 0 : index
    %99 = vector.load %arg9[%c16, %c0_47] : memref<32x128xf32, #tpu.memory_space<vmem>>, vector<16x128xf32>
    tpu.vector_store %arg9[%c16, %c0_47], %98 {strides = array<i32>} : memref<32x128xf32, #tpu.memory_space<vmem>>, vector<16x128xf32>,
    return
  }
  func.func @transform_0(%arg0: i32) -> (i32, i32) {
    %c0_i32 = arith.constant 0 : i32
    %c0_i32_0 = arith.constant 0 : i32
    return %arg0, %c0_i32 : i32, i32
  }
  func.func @transform_1(%arg0: i32) -> (i32, i32) {
    %c0_i32 = arith.constant 0 : i32
    %c0_i32_0 = arith.constant 0 : i32
    return %arg0, %c0_i32 : i32, i32
  }
  func.func @transform_2(%arg0: i32) -> (i32, i32) {
    %c0_i32 = arith.constant 0 : i32
    %c0_i32_0 = arith.constant 0 : i32
    %c0_i32_1 = arith.constant 0 : i32
    return %c0_i32, %c0_i32_0 : i32, i32
  }
  func.func @transform_3(%arg0: i32) -> (i32, i32) {
    %c0_i32 = arith.constant 0 : i32
    %c0_i32_0 = arith.constant 0 : i32
    %c0_i32_1 = arith.constant 0 : i32
    return %c0_i32, %c0_i32_0 : i32, i32
  }
  func.func @transform_4(%arg0: i32) -> (i32, i32, i32) {
    %c0_i32 = arith.constant 0 : i32
    %c0_i32_0 = arith.constant 0 : i32
    %c0_i32_1 = arith.constant 0 : i32
    %c0_i32_2 = arith.constant 0 : i32
    return %c0_i32, %c0_i32_0, %c0_i32_1 : i32, i32, i32
  }
  func.func @transform_5(%arg0: i32) -> (i32, i32) {
    %c0_i32 = arith.constant 0 : i32
    %c0_i32_0 = arith.constant 0 : i32
    %c0_i32_1 = arith.constant 0 : i32
    return %c0_i32, %c0_i32_0 : i32, i32
  }
  func.func @transform_6(%arg0: i32) -> (i32, i32) {
    %c0_i32 = arith.constant 0 : i32
    %c0_i32_0 = arith.constant 0 : i32
    %c0_i32_1 = arith.constant 0 : i32
    return %c0_i32, %c0_i32_0 : i32, i32
  }
  func.func @transform_7(%arg0: i32) -> (i32, i32) {
    %c0_i32 = arith.constant 0 : i32
    %c0_i32_0 = arith.constant 0 : i32
    %c0_i32_1 = arith.constant 0 : i32
    return %c0_i32, %c0_i32_0 : i32, i32
  }
  func.func @transform_8(%arg0: i32) -> (i32, i32) {
    %c0_i32 = arith.constant 0 : i32
    %c0_i32_0 = arith.constant 0 : i32
    return %arg0, %c0_i32 : i32, i32
  }
}

</mosaic_0001>

<llo_original>
// kernel: refine_forward.1
$region0: #{refine_forward.1}
  #allocation0 [shape = 'u32[]', space=smem, size = 0x4, offset = 0x4, fixed_abs, tag = 'smem constant byte address 0x4 - core index']
  #allocation1 [shape = 'u32[144,128]{1,0:T(1,128)}', space=vmem, size = 0x12000, scoped, tag = 'internal scratch']
  %s0 = inlined_call_operand.vmem [shape: bf16[64,64], index: 0, kind: input, shape index: {}]
  %s1 = inlined_call_operand.vmem [shape: bf16[32,64], index: 1, kind: input, shape index: {}]
  %s2 = inlined_call_operand.vmem [shape: f32[36,1], index: 2, kind: input, shape index: {}]
  %s3 = inlined_call_operand.vmem [shape: bf16[192,128], index: 3, kind: input, shape index: {}]
  %s4 = inlined_call_operand.vmem [shape: bf16[4,384,128], index: 4, kind: input, shape index: {}]
  %s5 = inlined_call_operand.vmem [shape: f32[5,128], index: 5, kind: input, shape index: {}]
  %s6 = inlined_call_operand.vmem [shape: bf16[36,16], index: 6, kind: input, shape index: {}]
  %s7 = inlined_call_operand.vmem [shape: bf16[64,128], index: 7, kind: input, shape index: {}]
  %s8 = inlined_call_operand.vmem [shape: f32[64,128], index: 8, kind: output, shape index: {}]
  %s9 = sld [smem:[#allocation0]]
  $region65: #{refine_forward.1} parent=0
    _
  %s11 = ssub.s32 1, %s9
  %s12 = scalar_select 0, %s11, %s9
  loop: start=0, step=1, limit=4
  $region2: #{refine_forward.1} parent=0 // loop_pre_header
    _
  $region3: #{refine_forward.1} parent=0 // loop_header
    %s14 = sphi 0, %s18
    %p15 = scmp.ge.s32.totalorder %s14, 4
    %s24 = sphi 0, %s26
    %s27 = sphi 0, %s24
    %s28 = sphi 0, %s27
    %s44 = sphi 0, %s28
    %s50 = sphi 0, %s52
    %s53 = sphi 0, %s50
    %s54 = sphi 0, %s53
    %s70 = sphi 0, %s54
    %s74 = sphi 0, %s74
    %s76 = sphi 0, %s74
    %s77 = sphi 0, %s76
    %s91 = sphi 0, %s77
    %s95 = sphi 0, %s95
    %s97 = sphi 0, %s95
    %s98 = sphi 0, %s97
    %s112 = sphi 0, %s98
    %s116 = sphi 0, %s116
    %s118 = sphi 0, %s116
    %s119 = sphi 0, %s118
    %s133 = sphi 0, %s119
    %s137 = sphi 0, %s137
    %s139 = sphi 0, %s137
    %s140 = sphi 0, %s139
    %s154 = sphi 0, %s140
    %s158 = sphi 0, %s158
    %s160 = sphi 0, %s158
    %s161 = sphi 0, %s160
    %s175 = sphi 0, %s161
    %s179 = sphi 0, %s179
    %s181 = sphi 0, %s179
    %s182 = sphi 0, %s181
    %s196 = sphi 0, %s182
    %s202 = sphi 0, %s204
    %s205 = sphi 0, %s202
    %s206 = sphi 0, %s205
    %s222 = sphi 0, %s206
  $region4: #{refine_forward.1} parent=0 // loop_header_branch
    %17 = sbr.rel (%p15) target = $region8
  $region5: #{refine_forward.1} parent=0 // loop_body
    %s19 = ssub.s32 %s14, 1
    %s20 = ssub.s32 %s14, 2
    %s21 = sadd.s32 %s14, 1
    %s22 = ssub.s32 %s14, %s21
    %p23 = scmp.eq.s32.totalorder %s22, 0
    %s25 = sadd.s32 %s24, 1
    %s26 = scalar_select %p23, %s24, %s25
    %p29 = pneg %p23
    %p30 = scmp.eq.s32.totalorder %s14, 1
    %p31 = por %p29, %p30
    %p32 = scmp.ne.s32.totalorder %s24, %s27
    %p33 = scmp.eq.s32.totalorder %s14, 0
    %p34 = por %p32, %p33
    %p35 = scmp.ne.s32.totalorder %s24, %s27
    %p36 = scmp.eq.s32.totalorder %s19, 1
    %p37 = por %p35, %p36
    %p38 = scmp.ne.s32.totalorder %s27, %s28
    %p39 = scmp.eq.s32.totalorder %s19, 0
    %p40 = por %p38, %p39
    %p41 = scmp.ne.s32.totalorder %s27, %s28
    %p42 = scmp.eq.s32.totalorder %s20, 1
    %p43 = por %p41, %p42
    %p45 = scmp.ne.s32.totalorder %s28, %s44
    %p46 = scmp.eq.s32.totalorder %s20, 0
    %p47 = por %p45, %p46
    %s48 = ssub.s32 %s14, %s21
    %p49 = scmp.eq.s32.totalorder %s48, 0
    %s51 = sadd.s32 %s50, 1
    %s52 = scalar_select %p49, %s50, %s51
    %p55 = pneg %p49
    %p56 = scmp.eq.s32.totalorder %s14, 1
    %p57 = por %p55, %p56
    %p58 = scmp.ne.s32.totalorder %s50, %s53
    %p59 = scmp.eq.s32.totalorder %s14, 0
    %p60 = por %p58, %p59
    %p61 = scmp.ne.s32.totalorder %s50, %s53
    %p62 = scmp.eq.s32.totalorder %s19, 1
    %p63 = por %p61, %p62
    %p64 = scmp.ne.s32.totalorder %s53, %s54
    %p65 = scmp.eq.s32.totalorder %s19, 0
    %p66 = por %p64, %p65
    %p67 = scmp.ne.s32.totalorder %s53, %s54
    %p68 = scmp.eq.s32.totalorder %s20, 1
    %p69 = por %p67, %p68
    %p71 = scmp.ne.s32.totalorder %s54, %s70
    %p72 = scmp.eq.s32.totalorder %s20, 0
    %p73 = por %p71, %p72
    %s75 = sadd.s32 %s74, 1
    %p78 = scmp.eq.s32.totalorder %s14, 1
    %p79 = scmp.ne.s32.totalorder %s74, %s76
    %p80 = scmp.eq.s32.totalorder %s14, 0
    %p81 = por %p79, %p80
    %p82 = scmp.ne.s32.totalorder %s74, %s76
    %p83 = scmp.eq.s32.totalorder %s19, 1
    %p84 = por %p82, %p83
    %p85 = scmp.ne.s32.totalorder %s76, %s77
    %p86 = scmp.eq.s32.totalorder %s19, 0
    %p87 = por %p85, %p86
    %p88 = scmp.ne.s32.totalorder %s76, %s77
    %p89 = scmp.eq.s32.totalorder %s20, 1
    %p90 = por %p88, %p89
    %p92 = scmp.ne.s32.totalorder %s77, %s91
    %p93 = scmp.eq.s32.totalorder %s20, 0
    %p94 = por %p92, %p93
    %s96 = sadd.s32 %s95, 1
    %p99 = scmp.eq.s32.totalorder %s14, 1
    %p100 = scmp.ne.s32.totalorder %s95, %s97
    %p101 = scmp.eq.s32.totalorder %s14, 0
    %p102 = por %p100, %p101
    %p103 = scmp.ne.s32.totalorder %s95, %s97
    %p104 = scmp.eq.s32.totalorder %s19, 1
    %p105 = por %p103, %p104
    %p106 = scmp.ne.s32.totalorder %s97, %s98
    %p107 = scmp.eq.s32.totalorder %s19, 0
    %p108 = por %p106, %p107
    %p109 = scmp.ne.s32.totalorder %s97, %s98
    %p110 = scmp.eq.s32.totalorder %s20, 1
    %p111 = por %p109, %p110
    %p113 = scmp.ne.s32.totalorder %s98, %s112
    %p114 = scmp.eq.s32.totalorder %s20, 0
    %p115 = por %p113, %p114
    %s117 = sadd.s32 %s116, 1
    %p120 = scmp.eq.s32.totalorder %s14, 1
    %p121 = scmp.ne.s32.totalorder %s116, %s118
    %p122 = scmp.eq.s32.totalorder %s14, 0
    %p123 = por %p121, %p122
    %p124 = scmp.ne.s32.totalorder %s116, %s118
    %p125 = scmp.eq.s32.totalorder %s19, 1
    %p126 = por %p124, %p125
    %p127 = scmp.ne.s32.totalorder %s118, %s119
    %p128 = scmp.eq.s32.totalorder %s19, 0
    %p129 = por %p127, %p128
    %p130 = scmp.ne.s32.totalorder %s118, %s119
    %p131 = scmp.eq.s32.totalorder %s20, 1
    %p132 = por %p130, %p131
    %p134 = scmp.ne.s32.totalorder %s119, %s133
    %p135 = scmp.eq.s32.totalorder %s20, 0
    %p136 = por %p134, %p135
    %s138 = sadd.s32 %s137, 1
    %p141 = scmp.eq.s32.totalorder %s14, 1
    %p142 = scmp.ne.s32.totalorder %s137, %s139
    %p143 = scmp.eq.s32.totalorder %s14, 0
    %p144 = por %p142, %p143
    %p145 = scmp.ne.s32.totalorder %s137, %s139
    %p146 = scmp.eq.s32.totalorder %s19, 1
    %p147 = por %p145, %p146
    %p148 = scmp.ne.s32.totalorder %s139, %s140
    %p149 = scmp.eq.s32.totalorder %s19, 0
    %p150 = por %p148, %p149
    %p151 = scmp.ne.s32.totalorder %s139, %s140
    %p152 = scmp.eq.s32.totalorder %s20, 1
    %p153 = por %p151, %p152
    %p155 = scmp.ne.s32.totalorder %s140, %s154
    %p156 = scmp.eq.s32.totalorder %s20, 0
    %p157 = por %p155, %p156
    %s159 = sadd.s32 %s158, 1
    %p162 = scmp.eq.s32.totalorder %s14, 1
    %p163 = scmp.ne.s32.totalorder %s158, %s160
    %p164 = scmp.eq.s32.totalorder %s14, 0
    %p165 = por %p163, %p164
    %p166 = scmp.ne.s32.totalorder %s158, %s160
    %p167 = scmp.eq.s32.totalorder %s19, 1
    %p168 = por %p166, %p167
    %p169 = scmp.ne.s32.totalorder %s160, %s161
    %p170 = scmp.eq.s32.totalorder %s19, 0
    %p171 = por %p169, %p170
    %p172 = scmp.ne.s32.totalorder %s160, %s161
    %p173 = scmp.eq.s32.totalorder %s20, 1
    %p174 = por %p172, %p173
    %p176 = scmp.ne.s32.totalorder %s161, %s175
    %p177 = scmp.eq.s32.totalorder %s20, 0
    %p178 = por %p176, %p177
    %s180 = sadd.s32 %s179, 1
    %p183 = scmp.eq.s32.totalorder %s14, 1
    %p184 = scmp.ne.s32.totalorder %s179, %s181
    %p185 = scmp.eq.s32.totalorder %s14, 0
    %p186 = por %p184, %p185
    %p187 = scmp.ne.s32.totalorder %s179, %s181
    %p188 = scmp.eq.s32.totalorder %s19, 1
    %p189 = por %p187, %p188
    %p190 = scmp.ne.s32.totalorder %s181, %s182
    %p191 = scmp.eq.s32.totalorder %s19, 0
    %p192 = por %p190, %p191
    %p193 = scmp.ne.s32.totalorder %s181, %s182
    %p194 = scmp.eq.s32.totalorder %s20, 1
    %p195 = por %p193, %p194
    %p197 = scmp.ne.s32.totalorder %s182, %s196
    %p198 = scmp.eq.s32.totalorder %s20, 0
    %p199 = por %p197, %p198
    %s200 = ssub.s32 %s14, %s21
    %p201 = scmp.eq.s32.totalorder %s200, 0
    %s203 = sadd.s32 %s202, 1
    %s204 = scalar_select %p201, %s202, %s203
    %p207 = pneg %p201
    %p208 = scmp.eq.s32.totalorder %s14, 1
    %p209 = por %p207, %p208
    %p210 = scmp.ne.s32.totalorder %s202, %s205
    %p211 = scmp.eq.s32.totalorder %s14, 0
    %p212 = por %p210, %p211
    %p213 = scmp.ne.s32.totalorder %s202, %s205
    %p214 = scmp.eq.s32.totalorder %s19, 1
    %p215 = por %p213, %p214
    %p216 = scmp.ne.s32.totalorder %s205, %s206
    %p217 = scmp.eq.s32.totalorder %s19, 0
    %p218 = por %p216, %p217
    %p219 = scmp.ne.s32.totalorder %s205, %s206
    %p220 = scmp.eq.s32.totalorder %s20, 1
    %p221 = por %p219, %p220
    %p223 = scmp.ne.s32.totalorder %s206, %s222
    %p224 = scmp.eq.s32.totalorder %s20, 0
    %p225 = por %p223, %p224
    %p226 = scmp.le.s32.totalorder 1, %s14
    %p227 = scmp.lt.s32.totalorder %s14, 3
    %p228 = pnand %p226, %p227
    %p229 = pneg %p228
    // Predicated region
    $region9: #{refine_forward.1} parent=5 // pred_check
      _
    $region10: #{refine_forward.1} parent=5 // pred_check_branch
      %231 = sbr.rel (%p228) target = $region12
    $region11: #{refine_forward.1} parent=5 // pred_region
      %s232 = ssub.s32 %s14, 1
      // Predicated region
      $region13: #{refine_forward.1} parent=11 // pred_check
        %p233 = pneg %p87
      $region14: #{refine_forward.1} parent=11 // pred_check_branch
        %235 = sbr.rel (%p233) target = $region16
      $region15: #{refine_forward.1} parent=11 // pred_region
        _
      $region16: #{refine_forward.1} parent=11 // pred_fallthru
        _
      // Predicated region
      $region17: #{refine_forward.1} parent=11 // pred_check
        %p236 = pneg %p108
      $region18: #{refine_forward.1} parent=11 // pred_check_branch
        %238 = sbr.rel (%p236) target = $region20
      $region19: #{refine_forward.1} parent=11 // pred_region
        _
      $region20: #{refine_forward.1} parent=11 // pred_fallthru
        _
      // Predicated region
      $region21: #{refine_forward.1} parent=11 // pred_check
        %p239 = pneg %p129
      $region22: #{refine_forward.1} parent=11 // pred_check_branch
        %241 = sbr.rel (%p239) target = $region24
      $region23: #{refine_forward.1} parent=11 // pred_region
        _
      $region24: #{refine_forward.1} parent=11 // pred_fallthru
        _
      // Predicated region
      $region25: #{refine_forward.1} parent=11 // pred_check
        %p242 = pneg %p150
      $region26: #{refine_forward.1} parent=11 // pred_check_branch
        %244 = sbr.rel (%p242) target = $region28
      $region27: #{refine_forward.1} parent=11 // pred_region
        _
      $region28: #{refine_forward.1} parent=11 // pred_fallthru
        _
      // Predicated region
      $region29: #{refine_forward.1} parent=11 // pred_check
        %p245 = pneg %p171
      $region30: #{refine_forward.1} parent=11 // pred_check_branch
        %247 = sbr.rel (%p245) target = $region32
      $region31: #{refine_forward.1} parent=11 // pred_region
        _
      $region32: #{refine_forward.1} parent=11 // pred_fallthru
        _
      // Predicated region
      $region33: #{refine_forward.1} parent=11 // pred_check
        %p248 = pneg %p192
      $region34: #{refine_forward.1} parent=11 // pred_check_branch
        %250 = sbr.rel (%p248) target = $region36
      $region35: #{refine_forward.1} parent=11 // pred_region
        _
      $region36: #{refine_forward.1} parent=11 // pred_fallthru
        _
    $region12: #{refine_forward.1} parent=5 // pred_fallthru
      _
    %p251 = scmp.lt.s32.totalorder %s14, 2
    // Predicated region
    $region37: #{refine_forward.1} parent=5 // pred_check
      %p252 = pneg %p251
    $region38: #{refine_forward.1} parent=5 // pred_check_branch
      %254 = sbr.rel (%p252) target = $region40
    $region39: #{refine_forward.1} parent=5 // pred_region
      // Predicated region
      $region41: #{refine_forward.1} parent=39 // pred_check
        %p255 = pneg %p34
      $region42: #{refine_forward.1} parent=39 // pred_check_branch
        %257 = sbr.rel (%p255) target = $region44
      $region43: #{refine_forward.1} parent=39 // pred_region
        %s258 = smul.u32 4, %s14
        %p259 = scmp.lt.s32.totalorder %s258, 7
        %s260 = scalar_select %p259, %s258, 7
        %s261 = smul.addr %s260, 4
        %s262 = scalar_lea.vmem %s0, %s261
        %s263 = smul.u32 4, %s14
      $region44: #{refine_forward.1} parent=39 // pred_fallthru
        _
      // Predicated region
      $region45: #{refine_forward.1} parent=39 // pred_check
        %p264 = pneg %p60
      $region46: #{refine_forward.1} parent=39 // pred_check_branch
        %266 = sbr.rel (%p264) target = $region48
      $region47: #{refine_forward.1} parent=39 // pred_region
        %s267 = smul.u32 2, %s14
        %p268 = scmp.lt.s32.totalorder %s267, 3
        %s269 = scalar_select %p268, %s267, 3
        %s270 = smul.addr %s269, 4
        %s271 = scalar_lea.vmem %s1, %s270
        %s272 = smul.u32 2, %s14
      $region48: #{refine_forward.1} parent=39 // pred_fallthru
        _
    $region40: #{refine_forward.1} parent=5 // pred_fallthru
      _
    %p273 = scmp.le.s32.totalorder 1, %s14
    %p274 = scmp.lt.s32.totalorder %s14, 3
    %p275 = pnand %p273, %p274
    %p276 = pneg %p275
    // Predicated region
    $region49: #{refine_forward.1} parent=5 // pred_check
      _
    $region50: #{refine_forward.1} parent=5 // pred_check_branch
      %278 = sbr.rel (%p275) target = $region52
    $region51: #{refine_forward.1} parent=5 // pred_region
      %s279 = ssub.s32 %s14, 1
      %s280 = smul.u32 4, %s19
      %p281 = scmp.lt.s32.totalorder %s280, 7
      %s282 = scalar_select %p281, %s280, 7
      %s283 = smul.addr %s282, 4
      %s284 = scalar_lea.vmem %s0, %s283
      %p285 = pneg %p40
      %p286 = pneg %p37
      %s287 = smul.u32 2, %s19
      %p288 = scmp.lt.s32.totalorder %s287, 3
      %s289 = scalar_select %p288, %s287, 3
      %s290 = smul.addr %s289, 4
      %s291 = scalar_lea.vmem %s1, %s290
      %p292 = pneg %p66
      %p293 = pneg %p63
      %p294 = pneg %p87
      %p295 = pneg %p84
      %p296 = pneg %p108
      %p297 = pneg %p105
      %p298 = pneg %p129
      %p299 = pneg %p126
      %p300 = pneg %p150
      %p301 = pneg %p147
      %p302 = pneg %p171
      %p303 = pneg %p168
      %p304 = pneg %p192
      %p305 = pneg %p189
      %p306 = pneg %p218
      %p307 = pneg %p215
      %s308 = smul.u32 4, %s19
      %p309 = scmp.lt.s32.totalorder %s308, 7
      %s310 = scalar_select %p309, %s308, 7
      %s311 = smul.addr %s310, 8
      %s312 = scalar_lea.vmem %s8, %s311
      %s313 = smul.u32 4, %s19
      %p314 = scmp.lt.s32.totalorder %s313, 7
      %s315 = scalar_select %p314, %s313, 7
      %s316 = smul.addr %s315, 4
      %s317 = scalar_lea.vmem %s0, %s316
      %s318 = smul.u32 4, %s19
      %s319 = smul.u32 2, %s19
      %p320 = scmp.lt.s32.totalorder %s319, 3
      %s321 = scalar_select %p320, %s319, 3
      %s322 = smul.addr %s321, 4
      %s323 = scalar_lea.vmem %s1, %s322
      %s324 = smul.u32 2, %s19
      %s325 = smul.u32 4, %s19
      %p326 = scmp.lt.s32.totalorder %s325, 7
      %s327 = scalar_select %p326, %s325, 7
      %s328 = smul.addr %s327, 8
      %s329 = scalar_lea.vmem %s8, %s328
      %s330 = smul.u32 4, %s19
      %v332 = vld [vmem:[%s2] sm:$0xff]
      %v333 = vld [vmem:[%s2 + $0x8] sm:$0xff]
      %v334 = vld [vmem:[%s2 + $0x10] sm:$0xff]
      %v335 = vld [vmem:[%s2 + $0x18] sm:$0xff]
      %v336 = vld [vmem:[%s2 + $0x20] sm:$0xf]
      %v337 = vld [vmem:[%s317] sm:$0xf]
      %v338 = vld [vmem:[%s317 + $0x4] sm:$0xf]
      %v339 = vld [vmem:[%s317 + $0x8] sm:$0xf]
      %v340 = vld [vmem:[%s317 + $0xc] sm:$0xf]
      %v341 = vunpack.c.l.bf16 %v337
      %v342 = vunpack.c.l.bf16 %v338
      %v343 = vunpack.c.l.bf16 %v339
      %v344 = vunpack.c.l.bf16 %v340
      %vm347 = vcmask 1040384
      %v348 = vrot.slane %v341, 7
      %v349 = vrot.slane %v342, 7
      %v350 = vsel %vm347, %v348, %v349
      %vm355 = vcmask 1042432
      %v356 = vrot.slane %v343, 5
      %v357 = vrot.slane %v344, 5
      %v358 = vsel %vm355, %v356, %v357
      %v361 = vsel %vm347, 0.0, %v348
      %v362 = vsel %vm347, %v349, 0.0
      %vm363 = vcmask 1041408
      %v364 = vsel %vm363, %v362, 0.0
      %v365 = vsel %vm355, %v364, %v356
      %v366 = vsel %vm355, %v357, 0.0
      %v367 = vld [vmem:[%s3] sm:$0xf]
      %v368 = vld [vmem:[%s3 + $0x4] sm:$0xf]
      %v369 = vld [vmem:[%s3 + $0x8] sm:$0xf]
      %v370 = vld [vmem:[%s3 + $0xc] sm:$0xf]
      %v371 = vld [vmem:[%s3 + $0x10] sm:$0xf]
      %v372 = vld [vmem:[%s3 + $0x14] sm:$0xf]
      %v373 = vld [vmem:[%s3 + $0x18] sm:$0xf]
      %v374 = vld [vmem:[%s3 + $0x1c] sm:$0xf]
      %v375 = vld [vmem:[%s3 + $0x20] sm:$0xf]
      %v376 = vld [vmem:[%s3 + $0x24] sm:$0xf]
      %v377 = vld [vmem:[%s3 + $0x28] sm:$0xf]
      %v378 = vld [vmem:[%s3 + $0x2c] sm:$0xf]
      %v379 = vld [vmem:[%s3 + $0x30] sm:$0xf]
      %v380 = vld [vmem:[%s3 + $0x34] sm:$0xf]
      %v381 = vld [vmem:[%s3 + $0x38] sm:$0xf]
      %v382 = vld [vmem:[%s3 + $0x3c] sm:$0xf]
      %v383 = vld [vmem:[%s3 + $0x40] sm:$0xf]
      %v384 = vld [vmem:[%s3 + $0x44] sm:$0xf]
      %v385 = vld [vmem:[%s3 + $0x48] sm:$0xf]
      %v386 = vld [vmem:[%s3 + $0x4c] sm:$0xf]
      %v387 = vld [vmem:[%s3 + $0x50] sm:$0xf]
      %v388 = vld [vmem:[%s3 + $0x54] sm:$0xf]
      %v389 = vld [vmem:[%s3 + $0x58] sm:$0xf]
      %v390 = vld [vmem:[%s3 + $0x5c] sm:$0xf]
      %v391 = vld [vmem:[%s5] sm:$0x1]
      %v395 = vrot.slane %v361, 7
      %v396 = vrot.slane %v350, 7
      %v397 = vsel %vm347, %v395, %v396
      %v398 = vrot.slane %v365, 7
      %v399 = vsel %vm347, %v396, %v398
      %v400 = vrot.slane %v358, 7
      %v401 = vsel %vm347, %v398, %v400
      %v402 = vrot.slane %v366, 7
      %v403 = vsel %vm347, %v400, %v402
      %v409 = vsel %vm347, 0.0, %v395
      %vm410 = vcmask 1046528
      %v411 = vrot.slane %v361, 1
      %v412 = vrot.slane %v350, 1
      %v413 = vsel %vm410, %v411, %v412
      %v414 = vrot.slane %v365, 1
      %v415 = vsel %vm410, %v412, %v414
      %v416 = vrot.slane %v358, 1
      %v417 = vsel %vm410, %v414, %v416
      %v418 = vrot.slane %v366, 1
      %v419 = vsel %vm410, %v416, %v418
      %v425 = vsel %vm355, %v418, 0.0
      %426 = vrot.lane.b32.xlu0 %v361, 64
      %v427 = vpop.permute.xlu0 %426
      %428 = vrot.lane.b32.xlu0 %v350, 64
      %v429 = vpop.permute.xlu0 %428
      %430 = vrot.lane.b32.xlu0 %v365, 64
      %v431 = vpop.permute.xlu0 %430
      %432 = vrot.lane.b32.xlu0 %v358, 64
      %v433 = vpop.permute.xlu0 %432
      %434 = vrot.lane.b32.xlu0 %v366, 64
      %v435 = vpop.permute.xlu0 %434
      %vm441 = vcmask 523264
      %v442 = vsel %vm441, %v409, %v427
      %v443 = vsel %vm441, %v397, %v429
      %v444 = vsel %vm441, %v399, %v431
      %v445 = vsel %vm441, %v401, %v433
      %v446 = vsel %vm441, %v403, %v435
      %v447 = vpack.c.bf16 %v443, %v442
      %v448 = vpack.c.bf16 %v415, %v413
      %v449 = vpack.c.bf16 %v445, %v444
      %v450 = vpack.c.bf16 %v419, %v417
      %v451 = vpack.c.bf16 %v446, %v446
      %v452 = vpack.c.bf16 %v425, %v425
      %v453 = vlaneseq
      %v454 = vshrl.u32 %v453, 7
      %v455 = vsub.s32 0, %v454
      %v456 = vrot.slane %v391, %v455
      %v481 = vunpack.c.l.b16 %v367
      %v482 = vunpack.c.l.b16 %v368
      %v483 = vunpack.c.l.b16 %v369
      %v484 = vunpack.c.l.b16 %v370
      %v485 = vunpack.c.l.b16 %v371
      %v486 = vunpack.c.l.b16 %v372
      %v487 = vunpack.c.l.b16 %v373
      %v488 = vunpack.c.l.b16 %v374
      %v489 = vunpack.c.l.b16 %v375
      %v490 = vunpack.c.l.b16 %v376
      %v491 = vunpack.c.l.b16 %v377
      %v492 = vunpack.c.l.b16 %v378
      %v493 = vunpack.c.l.b16 %v379
      %v494 = vunpack.c.l.b16 %v380
      %v495 = vunpack.c.l.b16 %v381
      %v496 = vunpack.c.l.b16 %v382
      %v497 = vunpack.c.l.b16 %v383
      %v498 = vunpack.c.l.b16 %v384
      %v499 = vunpack.c.l.b16 %v385
      %v500 = vunpack.c.l.b16 %v386
      %v501 = vunpack.c.l.b16 %v387
      %v502 = vunpack.c.l.b16 %v388
      %v503 = vunpack.c.l.b16 %v389
      %v504 = vunpack.c.l.b16 %v390
      %v505 = vpack.c.b16 %v482, %v481
      %v506 = vpack.c.b16 %v484, %v483
      %v507 = vpack.c.b16 %v486, %v485
      %v508 = vpack.c.b16 %v488, %v487
      %v509 = vpack.c.b16 %v490, %v489
      %v510 = vpack.c.b16 %v492, %v491
      %v511 = vpack.c.b16 %v494, %v493
      %v512 = vpack.c.b16 %v496, %v495
      %v513 = vpack.c.b16 %v498, %v497
      %v514 = vpack.c.b16 %v500, %v499
      %v515 = vpack.c.b16 %v502, %v501
      %v516 = vpack.c.b16 %v504, %v503
      %v530 = vsel %vm441, %v448, 0
      %v533 = vsel %vm441, %v450, 0
      %v536 = vsel %vm441, %v452, 0
      %538 = vmatprep.subr.bf16.mxu0 0
      %539 = vmatpush1.bf16.msra.mxu0 %v505
      %540 = vmatprep.subr.bf16.mxu0 0
      %541 = vmatpush1.bf16.msra.mxu0 %v506
      %542 = vmatprep.subr.bf16.mxu0 0
      %543 = vmatpush1.bf16.msra.mxu0 %v507
      %544 = vmatprep.subr.bf16.mxu0 0
      %545 = vmatpush1.bf16.msra.mxu0 %v508
      %546 = vmatprep.subr.bf16.mxu0 0
      %547 = vmatpush1.bf16.msra.mxu0 %v509
      %548 = vmatprep.subr.bf16.mxu0 0
      %549 = vmatpush1.bf16.msra.mxu0 %v510
      %550 = vmatprep.subr.bf16.mxu0 0
      %551 = vmatpush1.bf16.msra.mxu0 %v511
      %552 = vmatprep.subr.bf16.mxu0 0
      %553 = vmatpush1.bf16.msra.mxu0 %v512
      %554 = vmatprep.subr.bf16.mxu0 0
      %555 = vmatpush1.bf16.msra.mxu0 %v513
      %556 = vmatprep.subr.bf16.mxu0 0
      %557 = vmatpush1.bf16.msra.mxu0 %v514
      %558 = vmatprep.subr.bf16.mxu0 0
      %559 = vmatpush1.bf16.msra.mxu0 %v515
      %560 = vmatprep.subr.bf16.mxu0 0
      %561 = vmatpush1.bf16.msra.mxu0 %v516
      %562 = vmatprep.subr.bf16.mxu0 0
      %563 = vmatpush1.bf16.msra.mxu0 0
      %564 = vmatprep.subr.bf16.mxu0 0
      %565 = vmatpush1.bf16.msra.mxu0 0
      %566 = vmatprep.subr.bf16.mxu0 0
      %567 = vmatpush1.bf16.msra.mxu0 0
      %568 = vmatprep.subr.bf16.mxu0 0
      %569 = vmatpush1.bf16.msra.mxu0 0
      %570 = vmatprep.mubr.bf16.mxu0 %v530
      %571 = vmatmul.mubr.bf16.gmra.mrb[0].mxu0 %v447
      %v572 = vpop.f32.mrb[0].mxu0
      %v573 = vadd.f32 %v456, %v572
      %v574 = vpop.f32.mrb[0].mxu0
      %v575 = vpop.f32.mrb[0].mxu0
      %v576 = vadd.f32 %v456, %v575
      %v577 = vpop.f32.mrb[0].mxu0
      %578 = vmatprep.mubr.bf16.mxu0 %v533
      %579 = vmatmul.mubr.bf16.gmra.mrb[0].mxu0 %v449
      %v580 = vpop.f32.mrb[0].mxu0
      %v581 = vadd.f32 %v456, %v580
      %v582 = vpop.f32.mrb[0].mxu0
      %v583 = vpop.f32.mrb[0].mxu0
      %v584 = vadd.f32 %v456, %v583
      %v585 = vpop.f32.mrb[0].mxu0
      %586 = vmatprep.mubr.bf16.mxu0 %v536
      %587 = vmatmul.mubr.bf16.gmra.mrb[0].mxu0 %v451
      %v588 = vpop.f32.mrb[0].mxu0
      %v589 = vadd.f32 %v456, %v588
      %v590 = vpop.f32.mrb[0].mxu0
      %v591 = vpop.f32.mrb[0].mxu0
      %v592 = vpop.f32.mrb[0].mxu0
      %593 = vdwg.mxu0
      %v594 = vmax.f32 %v573, 0.0
      %v595 = vmax.f32 %v576, 0.0
      %v596 = vmax.f32 %v581, 0.0
      %v597 = vmax.f32 %v584, 0.0
      %v598 = vmax.f32 %v589, 0.0
      %600 = vset.pattern.permute.xlu0 0
      %601 = vperm.xlu0 %600, %v332
      %v602 = vpop.permute.xlu0 %601
      %605 = vset.pattern.permute.xlu0 0
      %606 = vperm.xlu0 %605, %v333
      %v607 = vpop.permute.xlu0 %606
      %610 = vset.pattern.permute.xlu0 0
      %611 = vperm.xlu0 %610, %v334
      %v612 = vpop.permute.xlu0 %611
      %615 = vset.pattern.permute.xlu0 0
      %616 = vperm.xlu0 %615, %v335
      %v617 = vpop.permute.xlu0 %616
      %620 = vset.pattern.permute.xlu0 0
      %621 = vperm.xlu0 %620, %v336
      %v622 = vpop.permute.xlu0 %621
      %v624 = vmul.f32 %v594, %v602
      %v625 = vmul.f32 %v595, %v607
      %v626 = vmul.f32 %v596, %v612
      %v627 = vmul.f32 %v597, %v617
      %v628 = vmul.f32 %v598, %v622
      %v629 = vld [vmem:[%s4] sm:$0xf]
      %v630 = vld [vmem:[%s4 + $0x4] sm:$0xf]
      %v631 = vld [vmem:[%s4 + $0x8] sm:$0xf]
      %v632 = vld [vmem:[%s4 + $0xc] sm:$0xf]
      %v633 = vld [vmem:[%s4 + $0x10] sm:$0xf]
      %v634 = vld [vmem:[%s4 + $0x14] sm:$0xf]
      %v635 = vld [vmem:[%s4 + $0x18] sm:$0xf]
      %v636 = vld [vmem:[%s4 + $0x1c] sm:$0xf]
      %v637 = vld [vmem:[%s4 + $0x20] sm:$0xf]
      %v638 = vld [vmem:[%s4 + $0x24] sm:$0xf]
      %v639 = vld [vmem:[%s4 + $0x28] sm:$0xf]
      %v640 = vld [vmem:[%s4 + $0x2c] sm:$0xf]
      %v641 = vld [vmem:[%s4 + $0x30] sm:$0xf]
      %v642 = vld [vmem:[%s4 + $0x34] sm:$0xf]
      %v643 = vld [vmem:[%s4 + $0x38] sm:$0xf]
      %v644 = vld [vmem:[%s4 + $0x3c] sm:$0xf]
      %v645 = vld [vmem:[%s4 + $0x40] sm:$0xf]
      %v646 = vld [vmem:[%s4 + $0x44] sm:$0xf]
      %v647 = vld [vmem:[%s4 + $0x48] sm:$0xf]
      %v648 = vld [vmem:[%s4 + $0x4c] sm:$0xf]
      %v649 = vld [vmem:[%s4 + $0x50] sm:$0xf]
      %v650 = vld [vmem:[%s4 + $0x54] sm:$0xf]
      %v651 = vld [vmem:[%s4 + $0x58] sm:$0xf]
      %v652 = vld [vmem:[%s4 + $0x5c] sm:$0xf]
      %v653 = vld [vmem:[%s4 + $0x60] sm:$0xf]
      %v654 = vld [vmem:[%s4 + $0x64] sm:$0xf]
      %v655 = vld [vmem:[%s4 + $0x68] sm:$0xf]
      %v656 = vld [vmem:[%s4 + $0x6c] sm:$0xf]
      %v657 = vld [vmem:[%s4 + $0x70] sm:$0xf]
      %v658 = vld [vmem:[%s4 + $0x74] sm:$0xf]
      %v659 = vld [vmem:[%s4 + $0x78] sm:$0xf]
      %v660 = vld [vmem:[%s4 + $0x7c] sm:$0xf]
      %v661 = vld [vmem:[%s4 + $0x80] sm:$0xf]
      %v662 = vld [vmem:[%s4 + $0x84] sm:$0xf]
      %v663 = vld [vmem:[%s4 + $0x88] sm:$0xf]
      %v664 = vld [vmem:[%s4 + $0x8c] sm:$0xf]
      %v665 = vld [vmem:[%s4 + $0x90] sm:$0xf]
      %v666 = vld [vmem:[%s4 + $0x94] sm:$0xf]
      %v667 = vld [vmem:[%s4 + $0x98] sm:$0xf]
      %v668 = vld [vmem:[%s4 + $0x9c] sm:$0xf]
      %v669 = vld [vmem:[%s4 + $0xa0] sm:$0xf]
      %v670 = vld [vmem:[%s4 + $0xa4] sm:$0xf]
      %v671 = vld [vmem:[%s4 + $0xa8] sm:$0xf]
      %v672 = vld [vmem:[%s4 + $0xac] sm:$0xf]
      %v673 = vld [vmem:[%s4 + $0xb0] sm:$0xf]
      %v674 = vld [vmem:[%s4 + $0xb4] sm:$0xf]
      %v675 = vld [vmem:[%s4 + $0xb8] sm:$0xf]
      %v676 = vld [vmem:[%s4 + $0xbc] sm:$0xf]
      %v677 = vld [vmem:[%s5 + $0x1] sm:$0x1]
      %v683 = vrot.slane %v624, 7
      %v684 = vrot.slane %v625, 7
      %v685 = vsel %vm347, %v683, %v684
      %v686 = vrot.slane %v626, 7
      %v687 = vsel %vm347, %v684, %v686
      %v688 = vrot.slane %v627, 7
      %v689 = vsel %vm347, %v686, %v688
      %v690 = vrot.slane %v628, 7
      %v691 = vsel %vm347, %v688, %v690
      %v697 = vsel %vm347, 0.0, %v683
      %v698 = vrot.slane %v624, 1
      %v699 = vrot.slane %v625, 1
      %v700 = vsel %vm410, %v698, %v699
      %v701 = vrot.slane %v626, 1
      %v702 = vsel %vm410, %v699, %v701
      %v703 = vrot.slane %v627, 1
      %v704 = vsel %vm410, %v701, %v703
      %v705 = vrot.slane %v628, 1
      %v706 = vsel %vm410, %v703, %v705
      %v712 = vsel %vm355, %v705, 0.0
      %v713 = vpack.c.bf16 %v685, %v697
      %v714 = vpack.c.bf16 %v625, %v624
      %v715 = vpack.c.bf16 %v702, %v700
      %v716 = vpack.c.bf16 %v689, %v687
      %v717 = vpack.c.bf16 %v627, %v626
      %v718 = vpack.c.bf16 %v706, %v704
      %v719 = vpack.c.bf16 %v691, %v691
      %v720 = vpack.c.bf16 %v628, %v628
      %v721 = vpack.c.bf16 %v712, %v712
      %v722 = vlaneseq
      %v723 = vshrl.u32 %v722, 7
      %v724 = vsub.s32 0, %v723
      %v725 = vrot.slane %v677, %v724
      %v774 = vunpack.c.l.b16 %v629
      %v775 = vunpack.c.l.b16 %v630
      %v776 = vunpack.c.l.b16 %v631
      %v777 = vunpack.c.l.b16 %v632
      %v778 = vunpack.c.l.b16 %v633
      %v779 = vunpack.c.l.b16 %v634
      %v780 = vunpack.c.l.b16 %v635
      %v781 = vunpack.c.l.b16 %v636
      %v782 = vunpack.c.l.b16 %v637
      %v783 = vunpack.c.l.b16 %v638
      %v784 = vunpack.c.l.b16 %v639
      %v785 = vunpack.c.l.b16 %v640
      %v786 = vunpack.c.l.b16 %v641
      %v787 = vunpack.c.l.b16 %v642
      %v788 = vunpack.c.l.b16 %v643
      %v789 = vunpack.c.l.b16 %v644
      %v790 = vunpack.c.l.b16 %v645
      %v791 = vunpack.c.l.b16 %v646
      %v792 = vunpack.c.l.b16 %v647
      %v793 = vunpack.c.l.b16 %v648
      %v794 = vunpack.c.l.b16 %v649
      %v795 = vunpack.c.l.b16 %v650
      %v796 = vunpack.c.l.b16 %v651
      %v797 = vunpack.c.l.b16 %v652
      %v798 = vunpack.c.l.b16 %v653
      %v799 = vunpack.c.l.b16 %v654
      %v800 = vunpack.c.l.b16 %v655
      %v801 = vunpack.c.l.b16 %v656
      %v802 = vunpack.c.l.b16 %v657
      %v803 = vunpack.c.l.b16 %v658
      %v804 = vunpack.c.l.b16 %v659
      %v805 = vunpack.c.l.b16 %v660
      %v806 = vunpack.c.l.b16 %v661
      %v807 = vunpack.c.l.b16 %v662
      %v808 = vunpack.c.l.b16 %v663
      %v809 = vunpack.c.l.b16 %v664
      %v810 = vunpack.c.l.b16 %v665
      %v811 = vunpack.c.l.b16 %v666
      %v812 = vunpack.c.l.b16 %v667
      %v813 = vunpack.c.l.b16 %v668
      %v814 = vunpack.c.l.b16 %v669
      %v815 = vunpack.c.l.b16 %v670
      %v816 = vunpack.c.l.b16 %v671
      %v817 = vunpack.c.l.b16 %v672
      %v818 = vunpack.c.l.b16 %v673
      %v819 = vunpack.c.l.b16 %v674
      %v820 = vunpack.c.l.b16 %v675
      %v821 = vunpack.c.l.b16 %v676
      %v822 = vpack.c.b16 %v775, %v774
      %v823 = vpack.c.b16 %v777, %v776
      %v824 = vpack.c.b16 %v779, %v778
      %v825 = vpack.c.b16 %v781, %v780
      %v826 = vpack.c.b16 %v783, %v782
      %v827 = vpack.c.b16 %v785, %v784
      %v828 = vpack.c.b16 %v787, %v786
      %v829 = vpack.c.b16 %v789, %v788
      %v830 = vpack.c.b16 %v791, %v790
      %v831 = vpack.c.b16 %v793, %v792
      %v832 = vpack.c.b16 %v795, %v794
      %v833 = vpack.c.b16 %v797, %v796
      %v834 = vpack.c.b16 %v799, %v798
      %v835 = vpack.c.b16 %v801, %v800
      %v836 = vpack.c.b16 %v803, %v802
      %v837 = vpack.c.b16 %v805, %v804
      %v838 = vpack.c.b16 %v807, %v806
      %v839 = vpack.c.b16 %v809, %v808
      %v840 = vpack.c.b16 %v811, %v810
      %v841 = vpack.c.b16 %v813, %v812
      %v842 = vpack.c.b16 %v815, %v814
      %v843 = vpack.c.b16 %v817, %v816
      %v844 = vpack.c.b16 %v819, %v818
      %v845 = vpack.c.b16 %v821, %v820
      %870 = vmatprep.subr.bf16.mxu0 0
      %871 = vmatpush1.bf16.msra.mxu0 %v822
      %872 = vmatprep.subr.bf16.mxu0 0
      %873 = vmatpush1.bf16.msra.mxu0 %v823
      %874 = vmatprep.subr.bf16.mxu0 0
      %875 = vmatpush1.bf16.msra.mxu0 %v824
      %876 = vmatprep.subr.bf16.mxu0 0
      %877 = vmatpush1.bf16.msra.mxu0 %v825
      %878 = vmatprep.subr.bf16.mxu0 0
      %879 = vmatpush1.bf16.msra.mxu0 %v826
      %880 = vmatprep.subr.bf16.mxu0 0
      %881 = vmatpush1.bf16.msra.mxu0 %v827
      %882 = vmatprep.subr.bf16.mxu0 0
      %883 = vmatpush1.bf16.msra.mxu0 %v828
      %884 = vmatprep.subr.bf16.mxu0 0
      %885 = vmatpush1.bf16.msra.mxu0 %v829
      %886 = vmatprep.subr.bf16.mxu0 0
      %887 = vmatpush1.bf16.msra.mxu0 %v830
      %888 = vmatprep.subr.bf16.mxu0 0
      %889 = vmatpush1.bf16.msra.mxu0 %v831
      %890 = vmatprep.subr.bf16.mxu0 0
      %891 = vmatpush1.bf16.msra.mxu0 %v832
      %892 = vmatprep.subr.bf16.mxu0 0
      %893 = vmatpush1.bf16.msra.mxu0 %v833
      %894 = vmatprep.subr.bf16.mxu0 0
      %895 = vmatpush1.bf16.msra.mxu0 %v834
      %896 = vmatprep.subr.bf16.mxu0 0
      %897 = vmatpush1.bf16.msra.mxu0 %v835
      %898 = vmatprep.subr.bf16.mxu0 0
      %899 = vmatpush1.bf16.msra.mxu0 %v836
      %900 = vmatprep.subr.bf16.mxu0 0
      %901 = vmatpush1.bf16.msra.mxu0 %v837
      %902 = vmatprep.mubr.bf16.mxu0 %v714
      %903 = vmatmul.mubr.bf16.gmra.mrb[0].mxu0 %v713
      %v904 = vpop.f32.mrb[0].mxu0
      %v905 = vadd.f32 %v725, %v904
      %v906 = vpop.f32.mrb[0].mxu0
      %v907 = vpop.f32.mrb[0].mxu0
      %v908 = vadd.f32 %v725, %v907
      %v909 = vpop.f32.mrb[0].mxu0
      %910 = vmatprep.mubr.bf16.mxu0 %v717
      %911 = vmatmul.mubr.bf16.gmra.mrb[0].mxu0 %v716
      %v912 = vpop.f32.mrb[0].mxu0
      %v913 = vadd.f32 %v725, %v912
      %v914 = vpop.f32.mrb[0].mxu0
      %v915 = vpop.f32.mrb[0].mxu0
      %v916 = vadd.f32 %v725, %v915
      %v917 = vpop.f32.mrb[0].mxu0
      %918 = vmatprep.mubr.bf16.mxu0 %v720
      %919 = vmatmul.mubr.bf16.gmra.mrb[0].mxu0 %v719
      %v920 = vpop.f32.mrb[0].mxu0
      %v921 = vadd.f32 %v725, %v920
      %v922 = vpop.f32.mrb[0].mxu0
      %v923 = vpop.f32.mrb[0].mxu0
      %v924 = vpop.f32.mrb[0].mxu0
      %925 = vdwg.mxu0
      %926 = vmatprep.subr.bf16.mxu0 0
      %927 = vmatpush1.bf16.msra.mxu0 %v838
      %928 = vmatprep.subr.bf16.mxu0 0
      %929 = vmatpush1.bf16.msra.mxu0 %v839
      %930 = vmatprep.subr.bf16.mxu0 0
      %931 = vmatpush1.bf16.msra.mxu0 %v840
      %932 = vmatprep.subr.bf16.mxu0 0
      %933 = vmatpush1.bf16.msra.mxu0 %v841
      %934 = vmatprep.subr.bf16.mxu0 0
      %935 = vmatpush1.bf16.msra.mxu0 %v842
      %936 = vmatprep.subr.bf16.mxu0 0
      %937 = vmatpush1.bf16.msra.mxu0 %v843
      %938 = vmatprep.subr.bf16.mxu0 0
      %939 = vmatpush1.bf16.msra.mxu0 %v844
      %940 = vmatprep.subr.bf16.mxu0 0
      %941 = vmatpush1.bf16.msra.mxu0 %v845
      %942 = vmatprep.subr.bf16.mxu0 0
      %943 = vmatpush1.bf16.msra.mxu0 0
      %944 = vmatprep.subr.bf16.mxu0 0
      %945 = vmatpush1.bf16.msra.mxu0 0
      %946 = vmatprep.subr.bf16.mxu0 0
      %947 = vmatpush1.bf16.msra.mxu0 0
      %948 = vmatprep.subr.bf16.mxu0 0
      %949 = vmatpush1.bf16.msra.mxu0 0
      %950 = vmatprep.subr.bf16.mxu0 0
      %951 = vmatpush1.bf16.msra.mxu0 0
      %952 = vmatprep.subr.bf16.mxu0 0
      %953 = vmatpush1.bf16.msra.mxu0 0
      %954 = vmatprep.subr.bf16.mxu0 0
      %955 = vmatpush1.bf16.msra.mxu0 0
      %956 = vmatprep.subr.bf16.mxu0 0
      %957 = vmatpush1.bf16.msra.mxu0 0
      %958 = vmatprep.mubr.bf16.mxu0 0
      %959 = vmatmul.mubr.bf16.gmra.mrb[0].mxu0 %v715
      %v960 = vpop.f32.mrb[0].mxu0
      %v961 = vadd.f32 %v905, %v960
      %v962 = vpop.f32.mrb[0].mxu0
      %v963 = vpop.f32.mrb[0].mxu0
      %v964 = vadd.f32 %v908, %v963
      %v965 = vpop.f32.mrb[0].mxu0
      %966 = vmatprep.mubr.bf16.mxu0 0
      %967 = vmatmul.mubr.bf16.gmra.mrb[0].mxu0 %v718
      %v968 = vpop.f32.mrb[0].mxu0
      %v969 = vadd.f32 %v913, %v968
      %v970 = vpop.f32.mrb[0].mxu0
      %v971 = vpop.f32.mrb[0].mxu0
      %v972 = vadd.f32 %v916, %v971
      %v973 = vpop.f32.mrb[0].mxu0
      %974 = vmatprep.mubr.bf16.mxu0 0
      %975 = vmatmul.mubr.bf16.gmra.mrb[0].mxu0 %v721
      %v976 = vpop.f32.mrb[0].mxu0
      %v977 = vadd.f32 %v921, %v976
      %v978 = vpop.f32.mrb[0].mxu0
      %v979 = vpop.f32.mrb[0].mxu0
      %v980 = vpop.f32.mrb[0].mxu0
      %981 = vdwg.mxu0
      %v982 = vmax.f32 %v961, 0.0
      %v983 = vmax.f32 %v964, 0.0
      %v984 = vmax.f32 %v969, 0.0
      %v985 = vmax.f32 %v972, 0.0
      %v986 = vmax.f32 %v977, 0.0
      %v987 = vmul.f32 %v982, %v602
      %v988 = vmul.f32 %v983, %v607
      %v989 = vmul.f32 %v984, %v612
      %v990 = vmul.f32 %v985, %v617
      %v991 = vmul.f32 %v986, %v622
      %s992 = scalar_lea.vmem %s4, 192
      %v993 = vld [vmem:[%s992] sm:$0xf]
      %v994 = vld [vmem:[%s992 + $0x4] sm:$0xf]
      %v995 = vld [vmem:[%s992 + $0x8] sm:$0xf]
      %v996 = vld [vmem:[%s992 + $0xc] sm:$0xf]
      %v997 = vld [vmem:[%s992 + $0x10] sm:$0xf]
      %v998 = vld [vmem:[%s992 + $0x14] sm:$0xf]
      %v999 = vld [vmem:[%s992 + $0x18] sm:$0xf]
      %v1000 = vld [vmem:[%s992 + $0x1c] sm:$0xf]
      %v1001 = vld [vmem:[%s992 + $0x20] sm:$0xf]
      %v1002 = vld [vmem:[%s992 + $0x24] sm:$0xf]
      %v1003 = vld [vmem:[%s992 + $0x28] sm:$0xf]
      %v1004 = vld [vmem:[%s992 + $0x2c] sm:$0xf]
      %v1005 = vld [vmem:[%s992 + $0x30] sm:$0xf]
      %v1006 = vld [vmem:[%s992 + $0x34] sm:$0xf]
      %v1007 = vld [vmem:[%s992 + $0x38] sm:$0xf]
      %v1008 = vld [vmem:[%s992 + $0x3c] sm:$0xf]
      %v1009 = vld [vmem:[%s992 + $0x40] sm:$0xf]
      %v1010 = vld [vmem:[%s992 + $0x44] sm:$0xf]
      %v1011 = vld [vmem:[%s992 + $0x48] sm:$0xf]
      %v1012 = vld [vmem:[%s992 + $0x4c] sm:$0xf]
      %v1013 = vld [vmem:[%s992 + $0x50] sm:$0xf]
      %v1014 = vld [vmem:[%s992 + $0x54] sm:$0xf]
      %v1015 = vld [vmem:[%s992 + $0x58] sm:$0xf]
      %v1016 = vld [vmem:[%s992 + $0x5c] sm:$0xf]
      %v1017 = vld [vmem:[%s992 + $0x60] sm:$0xf]
      %v1018 = vld [vmem:[%s992 + $0x64] sm:$0xf]
      %v1019 = vld [vmem:[%s992 + $0x68] sm:$0xf]
      %v1020 = vld [vmem:[%s992 + $0x6c] sm:$0xf]
      %v1021 = vld [vmem:[%s992 + $0x70] sm:$0xf]
      %v1022 = vld [vmem:[%s992 + $0x74] sm:$0xf]
      %v1023 = vld [vmem:[%s992 + $0x78] sm:$0xf]
      %v1024 = vld [vmem:[%s992 + $0x7c] sm:$0xf]
      %v1025 = vld [vmem:[%s992 + $0x80] sm:$0xf]
      %v1026 = vld [vmem:[%s992 + $0x84] sm:$0xf]
      %v1027 = vld [vmem:[%s992 + $0x88] sm:$0xf]
      %v1028 = vld [vmem:[%s992 + $0x8c] sm:$0xf]
      %v1029 = vld [vmem:[%s992 + $0x90] sm:$0xf]
      %v1030 = vld [vmem:[%s992 + $0x94] sm:$0xf]
      %v1031 = vld [vmem:[%s992 + $0x98] sm:$0xf]
      %v1032 = vld [vmem:[%s992 + $0x9c] sm:$0xf]
      %v1033 = vld [vmem:[%s992 + $0xa0] sm:$0xf]
      %v1034 = vld [vmem:[%s992 + $0xa4] sm:$0xf]
      %v1035 = vld [vmem:[%s992 + $0xa8] sm:$0xf]
      %v1036 = vld [vmem:[%s992 + $0xac] sm:$0xf]
      %v1037 = vld [vmem:[%s992 + $0xb0] sm:$0xf]
      %v1038 = vld [vmem:[%s992 + $0xb4] sm:$0xf]
      %v1039 = vld [vmem:[%s992 + $0xb8] sm:$0xf]
      %v1040 = vld [vmem:[%s992 + $0xbc] sm:$0xf]
      %v1041 = vld [vmem:[%s5 + $0x2] sm:$0x1]
      %v1047 = vrot.slane %v987, 7
      %v1048 = vrot.slane %v988, 7
      %v1049 = vsel %vm347, %v1047, %v1048
      %v1050 = vrot.slane %v989, 7
      %v1051 = vsel %vm347, %v1048, %v1050
      %v1052 = vrot.slane %v990, 7
      %v1053 = vsel %vm347, %v1050, %v1052
      %v1054 = vrot.slane %v991, 7
      %v1055 = vsel %vm347, %v1052, %v1054
      %v1061 = vsel %vm347, 0.0, %v1047
      %v1062 = vrot.slane %v987, 1
      %v1063 = vrot.slane %v988, 1
      %v1064 = vsel %vm410, %v1062, %v1063
      %v1065 = vrot.slane %v989, 1
      %v1066 = vsel %vm410, %v1063, %v1065
      %v1067 = vrot.slane %v990, 1
      %v1068 = vsel %vm410, %v1065, %v1067
      %v1069 = vrot.slane %v991, 1
      %v1070 = vsel %vm410, %v1067, %v1069
      %v1076 = vsel %vm355, %v1069, 0.0
      %v1077 = vpack.c.bf16 %v1049, %v1061
      %v1078 = vpack.c.bf16 %v988, %v987
      %v1079 = vpack.c.bf16 %v1066, %v1064
      %v1080 = vpack.c.bf16 %v1053, %v1051
      %v1081 = vpack.c.bf16 %v990, %v989
      %v1082 = vpack.c.bf16 %v1070, %v1068
      %v1083 = vpack.c.bf16 %v1055, %v1055
      %v1084 = vpack.c.bf16 %v991, %v991
      %v1085 = vpack.c.bf16 %v1076, %v1076
      %v1086 = vlaneseq
      %v1087 = vshrl.u32 %v1086, 7
      %v1088 = vsub.s32 0, %v1087
      %v1089 = vrot.slane %v1041, %v1088
      %v1138 = vunpack.c.l.b16 %v993
      %v1139 = vunpack.c.l.b16 %v994
      %v1140 = vunpack.c.l.b16 %v995
      %v1141 = vunpack.c.l.b16 %v996
      %v1142 = vunpack.c.l.b16 %v997
      %v1143 = vunpack.c.l.b16 %v998
      %v1144 = vunpack.c.l.b16 %v999
      %v1145 = vunpack.c.l.b16 %v1000
      %v1146 = vunpack.c.l.b16 %v1001
      %v1147 = vunpack.c.l.b16 %v1002
      %v1148 = vunpack.c.l.b16 %v1003
      %v1149 = vunpack.c.l.b16 %v1004
      %v1150 = vunpack.c.l.b16 %v1005
      %v1151 = vunpack.c.l.b16 %v1006
      %v1152 = vunpack.c.l.b16 %v1007
      %v1153 = vunpack.c.l.b16 %v1008
      %v1154 = vunpack.c.l.b16 %v1009
      %v1155 = vunpack.c.l.b16 %v1010
      %v1156 = vunpack.c.l.b16 %v1011
      %v1157 = vunpack.c.l.b16 %v1012
      %v1158 = vunpack.c.l.b16 %v1013
      %v1159 = vunpack.c.l.b16 %v1014
      %v1160 = vunpack.c.l.b16 %v1015
      %v1161 = vunpack.c.l.b16 %v1016
      %v1162 = vunpack.c.l.b16 %v1017
      %v1163 = vunpack.c.l.b16 %v1018
      %v1164 = vunpack.c.l.b16 %v1019
      %v1165 = vunpack.c.l.b16 %v1020
      %v1166 = vunpack.c.l.b16 %v1021
      %v1167 = vunpack.c.l.b16 %v1022
      %v1168 = vunpack.c.l.b16 %v1023
      %v1169 = vunpack.c.l.b16 %v1024
      %v1170 = vunpack.c.l.b16 %v1025
      %v1171 = vunpack.c.l.b16 %v1026
      %v1172 = vunpack.c.l.b16 %v1027
      %v1173 = vunpack.c.l.b16 %v1028
      %v1174 = vunpack.c.l.b16 %v1029
      %v1175 = vunpack.c.l.b16 %v1030
      %v1176 = vunpack.c.l.b16 %v1031
      %v1177 = vunpack.c.l.b16 %v1032
      %v1178 = vunpack.c.l.b16 %v1033
      %v1179 = vunpack.c.l.b16 %v1034
      %v1180 = vunpack.c.l.b16 %v1035
      %v1181 = vunpack.c.l.b16 %v1036
      %v1182 = vunpack.c.l.b16 %v1037
      %v1183 = vunpack.c.l.b16 %v1038
      %v1184 = vunpack.c.l.b16 %v1039
      %v1185 = vunpack.c.l.b16 %v1040
      %v1186 = vpack.c.b16 %v1139, %v1138
      %v1187 = vpack.c.b16 %v1141, %v1140
      %v1188 = vpack.c.b16 %v1143, %v1142
      %v1189 = vpack.c.b16 %v1145, %v1144
      %v1190 = vpack.c.b16 %v1147, %v1146
      %v1191 = vpack.c.b16 %v1149, %v1148
      %v1192 = vpack.c.b16 %v1151, %v1150
      %v1193 = vpack.c.b16 %v1153, %v1152
      %v1194 = vpack.c.b16 %v1155, %v1154
      %v1195 = vpack.c.b16 %v1157, %v1156
      %v1196 = vpack.c.b16 %v1159, %v1158
      %v1197 = vpack.c.b16 %v1161, %v1160
      %v1198 = vpack.c.b16 %v1163, %v1162
      %v1199 = vpack.c.b16 %v1165, %v1164
      %v1200 = vpack.c.b16 %v1167, %v1166
      %v1201 = vpack.c.b16 %v1169, %v1168
      %v1202 = vpack.c.b16 %v1171, %v1170
      %v1203 = vpack.c.b16 %v1173, %v1172
      %v1204 = vpack.c.b16 %v1175, %v1174
      %v1205 = vpack.c.b16 %v1177, %v1176
      %v1206 = vpack.c.b16 %v1179, %v1178
      %v1207 = vpack.c.b16 %v1181, %v1180
      %v1208 = vpack.c.b16 %v1183, %v1182
      %v1209 = vpack.c.b16 %v1185, %v1184
      %1234 = vmatprep.subr.bf16.mxu0 0
      %1235 = vmatpush1.bf16.msra.mxu0 %v1186
      %1236 = vmatprep.subr.bf16.mxu0 0
      %1237 = vmatpush1.bf16.msra.mxu0 %v1187
      %1238 = vmatprep.subr.bf16.mxu0 0
      %1239 = vmatpush1.bf16.msra.mxu0 %v1188
      %1240 = vmatprep.subr.bf16.mxu0 0
      %1241 = vmatpush1.bf16.msra.mxu0 %v1189
      %1242 = vmatprep.subr.bf16.mxu0 0
      %1243 = vmatpush1.bf16.msra.mxu0 %v1190
      %1244 = vmatprep.subr.bf16.mxu0 0
      %1245 = vmatpush1.bf16.msra.mxu0 %v1191
      %1246 = vmatprep.subr.bf16.mxu0 0
      %1247 = vmatpush1.bf16.msra.mxu0 %v1192
      %1248 = vmatprep.subr.bf16.mxu0 0
      %1249 = vmatpush1.bf16.msra.mxu0 %v1193
      %1250 = vmatprep.subr.bf16.mxu0 0
      %1251 = vmatpush1.bf16.msra.mxu0 %v1194
      %1252 = vmatprep.subr.bf16.mxu0 0
      %1253 = vmatpush1.bf16.msra.mxu0 %v1195
      %1254 = vmatprep.subr.bf16.mxu0 0
      %1255 = vmatpush1.bf16.msra.mxu0 %v1196
      %1256 = vmatprep.subr.bf16.mxu0 0
      %1257 = vmatpush1.bf16.msra.mxu0 %v1197
      %1258 = vmatprep.subr.bf16.mxu0 0
      %1259 = vmatpush1.bf16.msra.mxu0 %v1198
      %1260 = vmatprep.subr.bf16.mxu0 0
      %1261 = vmatpush1.bf16.msra.mxu0 %v1199
      %1262 = vmatprep.subr.bf16.mxu0 0
      %1263 = vmatpush1.bf16.msra.mxu0 %v1200
      %1264 = vmatprep.subr.bf16.mxu0 0
      %1265 = vmatpush1.bf16.msra.mxu0 %v1201
      %1266 = vmatprep.mubr.bf16.mxu0 %v1078
      %1267 = vmatmul.mubr.bf16.gmra.mrb[0].mxu0 %v1077
      %v1268 = vpop.f32.mrb[0].mxu0
      %v1269 = vadd.f32 %v1089, %v1268
      %v1270 = vpop.f32.mrb[0].mxu0
      %v1271 = vpop.f32.mrb[0].mxu0
      %v1272 = vadd.f32 %v1089, %v1271
      %v1273 = vpop.f32.mrb[0].mxu0
      %1274 = vmatprep.mubr.bf16.mxu0 %v1081
      %1275 = vmatmul.mubr.bf16.gmra.mrb[0].mxu0 %v1080
      %v1276 = vpop.f32.mrb[0].mxu0
      %v1277 = vadd.f32 %v1089, %v1276
      %v1278 = vpop.f32.mrb[0].mxu0
      %v1279 = vpop.f32.mrb[0].mxu0
      %v1280 = vadd.f32 %v1089, %v1279
      %v1281 = vpop.f32.mrb[0].mxu0
      %1282 = vmatprep.mubr.bf16.mxu0 %v1084
      %1283 = vmatmul.mubr.bf16.gmra.mrb[0].mxu0 %v1083
      %v1284 = vpop.f32.mrb[0].mxu0
      %v1285 = vadd.f32 %v1089, %v1284
      %v1286 = vpop.f32.mrb[0].mxu0
      %v1287 = vpop.f32.mrb[0].mxu0
      %v1288 = vpop.f32.mrb[0].mxu0
      %1289 = vdwg.mxu0
      %1290 = vmatprep.subr.bf16.mxu0 0
      %1291 = vmatpush1.bf16.msra.mxu0 %v1202
      %1292 = vmatprep.subr.bf16.mxu0 0
      %1293 = vmatpush1.bf16.msra.mxu0 %v1203
      %1294 = vmatprep.subr.bf16.mxu0 0
      %1295 = vmatpush1.bf16.msra.mxu0 %v1204
      %1296 = vmatprep.subr.bf16.mxu0 0
      %1297 = vmatpush1.bf16.msra.mxu0 %v1205
      %1298 = vmatprep.subr.bf16.mxu0 0
      %1299 = vmatpush1.bf16.msra.mxu0 %v1206
      %1300 = vmatprep.subr.bf16.mxu0 0
      %1301 = vmatpush1.bf16.msra.mxu0 %v1207
      %1302 = vmatprep.subr.bf16.mxu0 0
      %1303 = vmatpush1.bf16.msra.mxu0 %v1208
      %1304 = vmatprep.subr.bf16.mxu0 0
      %1305 = vmatpush1.bf16.msra.mxu0 %v1209
      %1306 = vmatprep.subr.bf16.mxu0 0
      %1307 = vmatpush1.bf16.msra.mxu0 0
      %1308 = vmatprep.subr.bf16.mxu0 0
      %1309 = vmatpush1.bf16.msra.mxu0 0
      %1310 = vmatprep.subr.bf16.mxu0 0
      %1311 = vmatpush1.bf16.msra.mxu0 0
      %1312 = vmatprep.subr.bf16.mxu0 0
      %1313 = vmatpush1.bf16.msra.mxu0 0
      %1314 = vmatprep.subr.bf16.mxu0 0
      %1315 = vmatpush1.bf16.msra.mxu0 0
      %1316 = vmatprep.subr.bf16.mxu0 0
      %1317 = vmatpush1.bf16.msra.mxu0 0
      %1318 = vmatprep.subr.bf16.mxu0 0
      %1319 = vmatpush1.bf16.msra.mxu0 0
      %1320 = vmatprep.subr.bf16.mxu0 0
      %1321 = vmatpush1.bf16.msra.mxu0 0
      %1322 = vmatprep.mubr.bf16.mxu0 0
      %1323 = vmatmul.mubr.bf16.gmra.mrb[0].mxu0 %v1079
      %v1324 = vpop.f32.mrb[0].mxu0
      %v1325 = vadd.f32 %v1269, %v1324
      %v1326 = vpop.f32.mrb[0].mxu0
      %v1327 = vpop.f32.mrb[0].mxu0
      %v1328 = vadd.f32 %v1272, %v1327
      %v1329 = vpop.f32.mrb[0].mxu0
      %1330 = vmatprep.mubr.bf16.mxu0 0
      %1331 = vmatmul.mubr.bf16.gmra.mrb[0].mxu0 %v1082
      %v1332 = vpop.f32.mrb[0].mxu0
      %v1333 = vadd.f32 %v1277, %v1332
      %v1334 = vpop.f32.mrb[0].mxu0
      %v1335 = vpop.f32.mrb[0].mxu0
      %v1336 = vadd.f32 %v1280, %v1335
      %v1337 = vpop.f32.mrb[0].mxu0
      %1338 = vmatprep.mubr.bf16.mxu0 0
      %1339 = vmatmul.mubr.bf16.gmra.mrb[0].mxu0 %v1085
      %v1340 = vpop.f32.mrb[0].mxu0
      %v1341 = vadd.f32 %v1285, %v1340
      %v1342 = vpop.f32.mrb[0].mxu0
      %v1343 = vpop.f32.mrb[0].mxu0
      %v1344 = vpop.f32.mrb[0].mxu0
      %1345 = vdwg.mxu0
      %v1346 = vadd.f32 %v573, %v1325
      %v1347 = vadd.f32 %v576, %v1328
      %v1348 = vadd.f32 %v581, %v1333
      %v1349 = vadd.f32 %v584, %v1336
      %v1350 = vadd.f32 %v589, %v1341
      %v1351 = vld [vmem:[%s6] sm:$0xf]
      %v1352 = vld [vmem:[%s6 + $0x4] sm:$0xf]
      %v1353 = vld [vmem:[%s6 + $0x8] sm:$0xf]
      %v1354 = vld [vmem:[%s6 + $0xc] sm:$0xf]
      %v1355 = vld [vmem:[%s6 + $0x10] sm:$0x3]
      %v1356 = vld [vmem:[%s323] sm:$0xf]
      %v1357 = vld [vmem:[%s323 + $0x4] sm:$0xf]
      %v1363 = vunpack.c.l.b16 %v1351
      %v1364 = vunpack.c.l.b16 %v1352
      %v1365 = vunpack.c.l.b16 %v1353
      %v1366 = vunpack.c.l.b16 %v1354
      %v1367 = vunpack.c.l.b16 %v1355
      %v1368 = vpack.c.b16 %v1364, %v1363
      %v1369 = vpack.c.b16 %v1366, %v1365
      %v1370 = vpack.c.b16 %v1367, %v1367
      %v1373 = vunpack.c.l.b16 %v1356
      %v1374 = vunpack.c.l.b16 %v1357
      %v1375 = vpack.c.b16 %v1374, %v1373
      %vm1377 = vcmask 130048
      %v1379 = vsel %vm1377, %v1368, 0
      %v1382 = vsel %vm1377, %v1369, 0
      %v1385 = vsel %vm1377, %v1370, 0
      %1387 = vmatprep.subr.bf16.mxu0 0
      %1388 = vmatpush1.bf16.msra.mxu0 %v1375
      %1389 = vmatprep.subr.bf16.mxu0 0
      %1390 = vmatpush1.bf16.msra.mxu0 0
      %1391 = vmatprep.subr.bf16.mxu0 0
      %1392 = vmatpush1.bf16.msra.mxu0 0
      %1393 = vmatprep.subr.bf16.mxu0 0
      %1394 = vmatpush1.bf16.msra.mxu0 0
      %1395 = vmatprep.subr.bf16.mxu0 0
      %1396 = vmatpush1.bf16.msra.mxu0 0
      %1397 = vmatprep.subr.bf16.mxu0 0
      %1398 = vmatpush1.bf16.msra.mxu0 0
      %1399 = vmatprep.subr.bf16.mxu0 0
      %1400 = vmatpush1.bf16.msra.mxu0 0
      %1401 = vmatprep.subr.bf16.mxu0 0
      %1402 = vmatpush1.bf16.msra.mxu0 0
      %1403 = vmatprep.subr.bf16.mxu0 0
      %1404 = vmatpush1.bf16.msra.mxu0 0
      %1405 = vmatprep.subr.bf16.mxu0 0
      %1406 = vmatpush1.bf16.msra.mxu0 0
      %1407 = vmatprep.subr.bf16.mxu0 0
      %1408 = vmatpush1.bf16.msra.mxu0 0
      %1409 = vmatprep.subr.bf16.mxu0 0
      %1410 = vmatpush1.bf16.msra.mxu0 0
      %1411 = vmatprep.subr.bf16.mxu0 0
      %1412 = vmatpush1.bf16.msra.mxu0 0
      %1413 = vmatprep.subr.bf16.mxu0 0
      %1414 = vmatpush1.bf16.msra.mxu0 0
      %1415 = vmatprep.subr.bf16.mxu0 0
      %1416 = vmatpush1.bf16.msra.mxu0 0
      %1417 = vmatprep.subr.bf16.mxu0 0
      %1418 = vmatpush1.bf16.msra.mxu0 0
      %1419 = vmatprep.mubr.bf16.mxu0 0
      %1420 = vmatmul.mubr.bf16.gmra.mrb[0].mxu0 %v1379
      %v1421 = vpop.f32.mrb[0].mxu0
      %v1422 = vadd.f32 0.0, %v1421
      %v1423 = vpop.f32.mrb[0].mxu0
      %v1424 = vpop.f32.mrb[0].mxu0
      %v1425 = vadd.f32 0.0, %v1424
      %v1426 = vpop.f32.mrb[0].mxu0
      %1427 = vmatprep.mubr.bf16.mxu0 0
      %1428 = vmatmul.mubr.bf16.gmra.mrb[0].mxu0 %v1382
      %v1429 = vpop.f32.mrb[0].mxu0
      %v1430 = vadd.f32 0.0, %v1429
      %v1431 = vpop.f32.mrb[0].mxu0
      %v1432 = vpop.f32.mrb[0].mxu0
      %v1433 = vadd.f32 0.0, %v1432
      %v1434 = vpop.f32.mrb[0].mxu0
      %1435 = vmatprep.mubr.bf16.mxu0 0
      %1436 = vmatmul.mubr.bf16.gmra.mrb[0].mxu0 %v1385
      %v1437 = vpop.f32.mrb[0].mxu0
      %v1438 = vadd.f32 0.0, %v1437
      %v1439 = vpop.f32.mrb[0].mxu0
      %v1440 = vpop.f32.mrb[0].mxu0
      %v1441 = vpop.f32.mrb[0].mxu0
      %1442 = vdwg.mxu0
      %v1443 = vpack.c.bf16 %v1425, %v1422
      %v1444 = vpack.c.bf16 %v1433, %v1430
      %v1445 = vpack.c.bf16 %v1438, %v1438
      %v1446 = vld [vmem:[%s7] sm:$0xf]
      %v1447 = vld [vmem:[%s7 + $0x4] sm:$0xf]
      %v1448 = vld [vmem:[%s7 + $0x8] sm:$0xf]
      %v1449 = vld [vmem:[%s7 + $0xc] sm:$0xf]
      %v1450 = vld [vmem:[%s7 + $0x10] sm:$0xf]
      %v1451 = vld [vmem:[%s7 + $0x14] sm:$0xf]
      %v1452 = vld [vmem:[%s7 + $0x18] sm:$0xf]
      %v1453 = vld [vmem:[%s7 + $0x1c] sm:$0xf]
      %v1462 = vunpack.c.l.b16 %v1446
      %v1463 = vunpack.c.l.b16 %v1447
      %v1464 = vunpack.c.l.b16 %v1448
      %v1465 = vunpack.c.l.b16 %v1449
      %v1466 = vunpack.c.l.b16 %v1450
      %v1467 = vunpack.c.l.b16 %v1451
      %v1468 = vunpack.c.l.b16 %v1452
      %v1469 = vunpack.c.l.b16 %v1453
      %v1470 = vpack.c.b16 %v1463, %v1462
      %v1471 = vpack.c.b16 %v1465, %v1464
      %v1472 = vpack.c.b16 %v1467, %v1466
      %v1473 = vpack.c.b16 %v1469, %v1468
      %v1479 = vsel %vm441, %v1443, 0
      %v1482 = vsel %vm441, %v1444, 0
      %v1485 = vsel %vm441, %v1445, 0
      %1487 = vmatprep.subr.bf16.mxu0 0
      %1488 = vmatpush1.bf16.msra.mxu0 %v1470
      %1489 = vmatprep.subr.bf16.mxu0 0
      %1490 = vmatpush1.bf16.msra.mxu0 %v1471
      %1491 = vmatprep.subr.bf16.mxu0 0
      %1492 = vmatpush1.bf16.msra.mxu0 %v1472
      %1493 = vmatprep.subr.bf16.mxu0 0
      %1494 = vmatpush1.bf16.msra.mxu0 %v1473
      %1495 = vmatprep.subr.bf16.mxu0 0
      %1496 = vmatpush1.bf16.msra.mxu0 0
      %1497 = vmatprep.subr.bf16.mxu0 0
      %1498 = vmatpush1.bf16.msra.mxu0 0
      %1499 = vmatprep.subr.bf16.mxu0 0
      %1500 = vmatpush1.bf16.msra.mxu0 0
      %1501 = vmatprep.subr.bf16.mxu0 0
      %1502 = vmatpush1.bf16.msra.mxu0 0
      %1503 = vmatprep.subr.bf16.mxu0 0
      %1504 = vmatpush1.bf16.msra.mxu0 0
      %1505 = vmatprep.subr.bf16.mxu0 0
      %1506 = vmatpush1.bf16.msra.mxu0 0
      %1507 = vmatprep.subr.bf16.mxu0 0
      %1508 = vmatpush1.bf16.msra.mxu0 0
      %1509 = vmatprep.subr.bf16.mxu0 0
      %1510 = vmatpush1.bf16.msra.mxu0 0
      %1511 = vmatprep.subr.bf16.mxu0 0
      %1512 = vmatpush1.bf16.msra.mxu0 0
      %1513 = vmatprep.subr.bf16.mxu0 0
      %1514 = vmatpush1.bf16.msra.mxu0 0
      %1515 = vmatprep.subr.bf16.mxu0 0
      %1516 = vmatpush1.bf16.msra.mxu0 0
      %1517 = vmatprep.subr.bf16.mxu0 0
      %1518 = vmatpush1.bf16.msra.mxu0 0
      %1519 = vmatprep.mubr.bf16.mxu0 0
      %1520 = vmatmul.mubr.bf16.gmra.mrb[0].mxu0 %v1479
      %v1521 = vpop.f32.mrb[0].mxu0
      %v1522 = vadd.f32 0.0, %v1521
      %v1523 = vpop.f32.mrb[0].mxu0
      %v1524 = vpop.f32.mrb[0].mxu0
      %v1525 = vadd.f32 0.0, %v1524
      %v1526 = vpop.f32.mrb[0].mxu0
      %1527 = vmatprep.mubr.bf16.mxu0 0
      %1528 = vmatmul.mubr.bf16.gmra.mrb[0].mxu0 %v1482
      %v1529 = vpop.f32.mrb[0].mxu0
      %v1530 = vadd.f32 0.0, %v1529
      %v1531 = vpop.f32.mrb[0].mxu0
      %v1532 = vpop.f32.mrb[0].mxu0
      %v1533 = vadd.f32 0.0, %v1532
      %v1534 = vpop.f32.mrb[0].mxu0
      %1535 = vmatprep.mubr.bf16.mxu0 0
      %1536 = vmatmul.mubr.bf16.gmra.mrb[0].mxu0 %v1485
      %v1537 = vpop.f32.mrb[0].mxu0
      %v1538 = vadd.f32 0.0, %v1537
      %v1539 = vpop.f32.mrb[0].mxu0
      %v1540 = vpop.f32.mrb[0].mxu0
      %v1541 = vpop.f32.mrb[0].mxu0
      %1542 = vdwg.mxu0
      %v1543 = vadd.f32 %v1346, %v1522
      %v1544 = vadd.f32 %v1347, %v1525
      %v1545 = vadd.f32 %v1348, %v1530
      %v1546 = vadd.f32 %v1349, %v1533
      %v1547 = vadd.f32 %v1350, %v1538
      %v1548 = vmax.f32 %v1543, 0.0
      %v1549 = vmax.f32 %v1544, 0.0
      %v1550 = vmax.f32 %v1545, 0.0
      %v1551 = vmax.f32 %v1546, 0.0
      %v1552 = vmax.f32 %v1547, 0.0
      %v1553 = vmul.f32 %v1548, %v602
      %v1554 = vmul.f32 %v1549, %v607
      %v1555 = vmul.f32 %v1550, %v612
      %v1556 = vmul.f32 %v1551, %v617
      %v1557 = vmul.f32 %v1552, %v622
      %s1558 = scalar_lea.vmem %s4, 384
      %v1559 = vld [vmem:[%s1558] sm:$0xf]
      %v1560 = vld [vmem:[%s1558 + $0x4] sm:$0xf]
      %v1561 = vld [vmem:[%s1558 + $0x8] sm:$0xf]
      %v1562 = vld [vmem:[%s1558 + $0xc] sm:$0xf]
      %v1563 = vld [vmem:[%s1558 + $0x10] sm:$0xf]
      %v1564 = vld [vmem:[%s1558 + $0x14] sm:$0xf]
      %v1565 = vld [vmem:[%s1558 + $0x18] sm:$0xf]
      %v1566 = vld [vmem:[%s1558 + $0x1c] sm:$0xf]
      %v1567 = vld [vmem:[%s1558 + $0x20] sm:$0xf]
      %v1568 = vld [vmem:[%s1558 + $0x24] sm:$0xf]
      %v1569 = vld [vmem:[%s1558 + $0x28] sm:$0xf]
      %v1570 = vld [vmem:[%s1558 + $0x2c] sm:$0xf]
      %v1571 = vld [vmem:[%s1558 + $0x30] sm:$0xf]
      %v1572 = vld [vmem:[%s1558 + $0x34] sm:$0xf]
      %v1573 = vld [vmem:[%s1558 + $0x38] sm:$0xf]
      %v1574 = vld [vmem:[%s1558 + $0x3c] sm:$0xf]
      %v1575 = vld [vmem:[%s1558 + $0x40] sm:$0xf]
      %v1576 = vld [vmem:[%s1558 + $0x44] sm:$0xf]
      %v1577 = vld [vmem:[%s1558 + $0x48] sm:$0xf]
      %v1578 = vld [vmem:[%s1558 + $0x4c] sm:$0xf]
      %v1579 = vld [vmem:[%s1558 + $0x50] sm:$0xf]
      %v1580 = vld [vmem:[%s1558 + $0x54] sm:$0xf]
      %v1581 = vld [vmem:[%s1558 + $0x58] sm:$0xf]
      %v1582 = vld [vmem:[%s1558 + $0x5c] sm:$0xf]
      %v1583 = vld [vmem:[%s1558 + $0x60] sm:$0xf]
      %v1584 = vld [vmem:[%s1558 + $0x64] sm:$0xf]
      %v1585 = vld [vmem:[%s1558 + $0x68] sm:$0xf]
      %v1586 = vld [vmem:[%s1558 + $0x6c] sm:$0xf]
      %v1587 = vld [vmem:[%s1558 + $0x70] sm:$0xf]
      %v1588 = vld [vmem:[%s1558 + $0x74] sm:$0xf]
      %v1589 = vld [vmem:[%s1558 + $0x78] sm:$0xf]
      %v1590 = vld [vmem:[%s1558 + $0x7c] sm:$0xf]
      %v1591 = vld [vmem:[%s1558 + $0x80] sm:$0xf]
      %v1592 = vld [vmem:[%s1558 + $0x84] sm:$0xf]
      %v1593 = vld [vmem:[%s1558 + $0x88] sm:$0xf]
      %v1594 = vld [vmem:[%s1558 + $0x8c] sm:$0xf]
      %v1595 = vld [vmem:[%s1558 + $0x90] sm:$0xf]
      %v1596 = vld [vmem:[%s1558 + $0x94] sm:$0xf]
      %v1597 = vld [vmem:[%s1558 + $0x98] sm:$0xf]
      %v1598 = vld [vmem:[%s1558 + $0x9c] sm:$0xf]
      %v1599 = vld [vmem:[%s1558 + $0xa0] sm:$0xf]
      %v1600 = vld [vmem:[%s1558 + $0xa4] sm:$0xf]
      %v1601 = vld [vmem:[%s1558 + $0xa8] sm:$0xf]
      %v1602 = vld [vmem:[%s1558 + $0xac] sm:$0xf]
      %v1603 = vld [vmem:[%s1558 + $0xb0] sm:$0xf]
      %v1604 = vld [vmem:[%s1558 + $0xb4] sm:$0xf]
      %v1605 = vld [vmem:[%s1558 + $0xb8] sm:$0xf]
      %v1606 = vld [vmem:[%s1558 + $0xbc] sm:$0xf]
      %v1607 = vld [vmem:[%s5 + $0x3] sm:$0x1]
      %v1613 = vrot.slane %v1553, 7
      %v1614 = vrot.slane %v1554, 7
      %v1615 = vsel %vm347, %v1613, %v1614
      %v1616 = vrot.slane %v1555, 7
      %v1617 = vsel %vm347, %v1614, %v1616
      %v1618 = vrot.slane %v1556, 7
      %v1619 = vsel %vm347, %v1616, %v1618
      %v1620 = vrot.slane %v1557, 7
      %v1621 = vsel %vm347, %v1618, %v1620
      %v1627 = vsel %vm347, 0.0, %v1613
      %v1628 = vrot.slane %v1553, 1
      %v1629 = vrot.slane %v1554, 1
      %v1630 = vsel %vm410, %v1628, %v1629
      %v1631 = vrot.slane %v1555, 1
      %v1632 = vsel %vm410, %v1629, %v1631
      %v1633 = vrot.slane %v1556, 1
      %v1634 = vsel %vm410, %v1631, %v1633
      %v1635 = vrot.slane %v1557, 1
      %v1636 = vsel %vm410, %v1633, %v1635
      %v1642 = vsel %vm355, %v1635, 0.0
      %v1643 = vpack.c.bf16 %v1615, %v1627
      %v1644 = vpack.c.bf16 %v1554, %v1553
      %v1645 = vpack.c.bf16 %v1632, %v1630
      %v1646 = vpack.c.bf16 %v1619, %v1617
      %v1647 = vpack.c.bf16 %v1556, %v1555
      %v1648 = vpack.c.bf16 %v1636, %v1634
      %v1649 = vpack.c.bf16 %v1621, %v1621
      %v1650 = vpack.c.bf16 %v1557, %v1557
      %v1651 = vpack.c.bf16 %v1642, %v1642
      %v1652 = vlaneseq
      %v1653 = vshrl.u32 %v1652, 7
      %v1654 = vsub.s32 0, %v1653
      %v1655 = vrot.slane %v1607, %v1654
      %v1704 = vunpack.c.l.b16 %v1559
      %v1705 = vunpack.c.l.b16 %v1560
      %v1706 = vunpack.c.l.b16 %v1561
      %v1707 = vunpack.c.l.b16 %v1562
      %v1708 = vunpack.c.l.b16 %v1563
      %v1709 = vunpack.c.l.b16 %v1564
      %v1710 = vunpack.c.l.b16 %v1565
      %v1711 = vunpack.c.l.b16 %v1566
      %v1712 = vunpack.c.l.b16 %v1567
      %v1713 = vunpack.c.l.b16 %v1568
      %v1714 = vunpack.c.l.b16 %v1569
      %v1715 = vunpack.c.l.b16 %v1570
      %v1716 = vunpack.c.l.b16 %v1571
      %v1717 = vunpack.c.l.b16 %v1572
      %v1718 = vunpack.c.l.b16 %v1573
      %v1719 = vunpack.c.l.b16 %v1574
      %v1720 = vunpack.c.l.b16 %v1575
      %v1721 = vunpack.c.l.b16 %v1576
      %v1722 = vunpack.c.l.b16 %v1577
      %v1723 = vunpack.c.l.b16 %v1578
      %v1724 = vunpack.c.l.b16 %v1579
      %v1725 = vunpack.c.l.b16 %v1580
      %v1726 = vunpack.c.l.b16 %v1581
      %v1727 = vunpack.c.l.b16 %v1582
      %v1728 = vunpack.c.l.b16 %v1583
      %v1729 = vunpack.c.l.b16 %v1584
      %v1730 = vunpack.c.l.b16 %v1585
      %v1731 = vunpack.c.l.b16 %v1586
      %v1732 = vunpack.c.l.b16 %v1587
      %v1733 = vunpack.c.l.b16 %v1588
      %v1734 = vunpack.c.l.b16 %v1589
      %v1735 = vunpack.c.l.b16 %v1590
      %v1736 = vunpack.c.l.b16 %v1591
      %v1737 = vunpack.c.l.b16 %v1592
      %v1738 = vunpack.c.l.b16 %v1593
      %v1739 = vunpack.c.l.b16 %v1594
      %v1740 = vunpack.c.l.b16 %v1595
      %v1741 = vunpack.c.l.b16 %v1596
      %v1742 = vunpack.c.l.b16 %v1597
      %v1743 = vunpack.c.l.b16 %v1598
      %v1744 = vunpack.c.l.b16 %v1599
      %v1745 = vunpack.c.l.b16 %v1600
      %v1746 = vunpack.c.l.b16 %v1601
      %v1747 = vunpack.c.l.b16 %v1602
      %v1748 = vunpack.c.l.b16 %v1603
      %v1749 = vunpack.c.l.b16 %v1604
      %v1750 = vunpack.c.l.b16 %v1605
      %v1751 = vunpack.c.l.b16 %v1606
      %v1752 = vpack.c.b16 %v1705, %v1704
      %v1753 = vpack.c.b16 %v1707, %v1706
      %v1754 = vpack.c.b16 %v1709, %v1708
      %v1755 = vpack.c.b16 %v1711, %v1710
      %v1756 = vpack.c.b16 %v1713, %v1712
      %v1757 = vpack.c.b16 %v1715, %v1714
      %v1758 = vpack.c.b16 %v1717, %v1716
      %v1759 = vpack.c.b16 %v1719, %v1718
      %v1760 = vpack.c.b16 %v1721, %v1720
      %v1761 = vpack.c.b16 %v1723, %v1722
      %v1762 = vpack.c.b16 %v1725, %v1724
      %v1763 = vpack.c.b16 %v1727, %v1726
      %v1764 = vpack.c.b16 %v1729, %v1728
      %v1765 = vpack.c.b16 %v1731, %v1730
      %v1766 = vpack.c.b16 %v1733, %v1732
      %v1767 = vpack.c.b16 %v1735, %v1734
      %v1768 = vpack.c.b16 %v1737, %v1736
      %v1769 = vpack.c.b16 %v1739, %v1738
      %v1770 = vpack.c.b16 %v1741, %v1740
      %v1771 = vpack.c.b16 %v1743, %v1742
      %v1772 = vpack.c.b16 %v1745, %v1744
      %v1773 = vpack.c.b16 %v1747, %v1746
      %v1774 = vpack.c.b16 %v1749, %v1748
      %v1775 = vpack.c.b16 %v1751, %v1750
      %1800 = vmatprep.subr.bf16.mxu0 0
      %1801 = vmatpush1.bf16.msra.mxu0 %v1752
      %1802 = vmatprep.subr.bf16.mxu0 0
      %1803 = vmatpush1.bf16.msra.mxu0 %v1753
      %1804 = vmatprep.subr.bf16.mxu0 0
      %1805 = vmatpush1.bf16.msra.mxu0 %v1754
      %1806 = vmatprep.subr.bf16.mxu0 0
      %1807 = vmatpush1.bf16.msra.mxu0 %v1755
      %1808 = vmatprep.subr.bf16.mxu0 0
      %1809 = vmatpush1.bf16.msra.mxu0 %v1756
      %1810 = vmatprep.subr.bf16.mxu0 0
      %1811 = vmatpush1.bf16.msra.mxu0 %v1757
      %1812 = vmatprep.subr.bf16.mxu0 0
      %1813 = vmatpush1.bf16.msra.mxu0 %v1758
      %1814 = vmatprep.subr.bf16.mxu0 0
      %1815 = vmatpush1.bf16.msra.mxu0 %v1759
      %1816 = vmatprep.subr.bf16.mxu0 0
      %1817 = vmatpush1.bf16.msra.mxu0 %v1760
      %1818 = vmatprep.subr.bf16.mxu0 0
      %1819 = vmatpush1.bf16.msra.mxu0 %v1761
      %1820 = vmatprep.subr.bf16.mxu0 0
      %1821 = vmatpush1.bf16.msra.mxu0 %v1762
      %1822 = vmatprep.subr.bf16.mxu0 0
      %1823 = vmatpush1.bf16.msra.mxu0 %v1763
      %1824 = vmatprep.subr.bf16.mxu0 0
      %1825 = vmatpush1.bf16.msra.mxu0 %v1764
      %1826 = vmatprep.subr.bf16.mxu0 0
      %1827 = vmatpush1.bf16.msra.mxu0 %v1765
      %1828 = vmatprep.subr.bf16.mxu0 0
      %1829 = vmatpush1.bf16.msra.mxu0 %v1766
      %1830 = vmatprep.subr.bf16.mxu0 0
      %1831 = vmatpush1.bf16.msra.mxu0 %v1767
      %1832 = vmatprep.mubr.bf16.mxu0 %v1644
      %1833 = vmatmul.mubr.bf16.gmra.mrb[0].mxu0 %v1643
      %v1834 = vpop.f32.mrb[0].mxu0
      %v1835 = vadd.f32 %v1655, %v1834
      %v1836 = vpop.f32.mrb[0].mxu0
      %v1837 = vpop.f32.mrb[0].mxu0
      %v1838 = vadd.f32 %v1655, %v1837
      %v1839 = vpop.f32.mrb[0].mxu0
      %1840 = vmatprep.mubr.bf16.mxu0 %v1647
      %1841 = vmatmul.mubr.bf16.gmra.mrb[0].mxu0 %v1646
      %v1842 = vpop.f32.mrb[0].mxu0
      %v1843 = vadd.f32 %v1655, %v1842
      %v1844 = vpop.f32.mrb[0].mxu0
      %v1845 = vpop.f32.mrb[0].mxu0
      %v1846 = vadd.f32 %v1655, %v1845
      %v1847 = vpop.f32.mrb[0].mxu0
      %1848 = vmatprep.mubr.bf16.mxu0 %v1650
      %1849 = vmatmul.mubr.bf16.gmra.mrb[0].mxu0 %v1649
      %v1850 = vpop.f32.mrb[0].mxu0
      %v1851 = vadd.f32 %v1655, %v1850
      %v1852 = vpop.f32.mrb[0].mxu0
      %v1853 = vpop.f32.mrb[0].mxu0
      %v1854 = vpop.f32.mrb[0].mxu0
      %1855 = vdwg.mxu0
      %1856 = vmatprep.subr.bf16.mxu0 0
      %1857 = vmatpush1.bf16.msra.mxu0 %v1768
      %1858 = vmatprep.subr.bf16.mxu0 0
      %1859 = vmatpush1.bf16.msra.mxu0 %v1769
      %1860 = vmatprep.subr.bf16.mxu0 0
      %1861 = vmatpush1.bf16.msra.mxu0 %v1770
      %1862 = vmatprep.subr.bf16.mxu0 0
      %1863 = vmatpush1.bf16.msra.mxu0 %v1771
      %1864 = vmatprep.subr.bf16.mxu0 0
      %1865 = vmatpush1.bf16.msra.mxu0 %v1772
      %1866 = vmatprep.subr.bf16.mxu0 0
      %1867 = vmatpush1.bf16.msra.mxu0 %v1773
      %1868 = vmatprep.subr.bf16.mxu0 0
      %1869 = vmatpush1.bf16.msra.mxu0 %v1774
      %1870 = vmatprep.subr.bf16.mxu0 0
      %1871 = vmatpush1.bf16.msra.mxu0 %v1775
      %1872 = vmatprep.subr.bf16.mxu0 0
      %1873 = vmatpush1.bf16.msra.mxu0 0
      %1874 = vmatprep.subr.bf16.mxu0 0
      %1875 = vmatpush1.bf16.msra.mxu0 0
      %1876 = vmatprep.subr.bf16.mxu0 0
      %1877 = vmatpush1.bf16.msra.mxu0 0
      %1878 = vmatprep.subr.bf16.mxu0 0
      %1879 = vmatpush1.bf16.msra.mxu0 0
      %1880 = vmatprep.subr.bf16.mxu0 0
      %1881 = vmatpush1.bf16.msra.mxu0 0
      %1882 = vmatprep.subr.bf16.mxu0 0
      %1883 = vmatpush1.bf16.msra.mxu0 0
      %1884 = vmatprep.subr.bf16.mxu0 0
      %1885 = vmatpush1.bf16.msra.mxu0 0
      %1886 = vmatprep.subr.bf16.mxu0 0
      %1887 = vmatpush1.bf16.msra.mxu0 0
      %1888 = vmatprep.mubr.bf16.mxu0 0
      %1889 = vmatmul.mubr.bf16.gmra.mrb[0].mxu0 %v1645
      %v1890 = vpop.f32.mrb[0].mxu0
      %v1891 = vadd.f32 %v1835, %v1890
      %v1892 = vpop.f32.mrb[0].mxu0
      %v1893 = vpop.f32.mrb[0].mxu0
      %v1894 = vadd.f32 %v1838, %v1893
      %v1895 = vpop.f32.mrb[0].mxu0
      %1896 = vmatprep.mubr.bf16.mxu0 0
      %1897 = vmatmul.mubr.bf16.gmra.mrb[0].mxu0 %v1648
      %v1898 = vpop.f32.mrb[0].mxu0
      %v1899 = vadd.f32 %v1843, %v1898
      %v1900 = vpop.f32.mrb[0].mxu0
      %v1901 = vpop.f32.mrb[0].mxu0
      %v1902 = vadd.f32 %v1846, %v1901
      %v1903 = vpop.f32.mrb[0].mxu0
      %1904 = vmatprep.mubr.bf16.mxu0 0
      %1905 = vmatmul.mubr.bf16.gmra.mrb[0].mxu0 %v1651
      %v1906 = vpop.f32.mrb[0].mxu0
      %v1907 = vadd.f32 %v1851, %v1906
      %v1908 = vpop.f32.mrb[0].mxu0
      %v1909 = vpop.f32.mrb[0].mxu0
      %v1910 = vpop.f32.mrb[0].mxu0
      %1911 = vdwg.mxu0
      %v1912 = vmax.f32 %v1891, 0.0
      %v1913 = vmax.f32 %v1894, 0.0
      %v1914 = vmax.f32 %v1899, 0.0
      %v1915 = vmax.f32 %v1902, 0.0
      %v1916 = vmax.f32 %v1907, 0.0
      %v1917 = vmul.f32 %v1912, %v602
      %v1918 = vmul.f32 %v1913, %v607
      %v1919 = vmul.f32 %v1914, %v612
      %v1920 = vmul.f32 %v1915, %v617
      %v1921 = vmul.f32 %v1916, %v622
      %s1922 = scalar_lea.vmem %s4, 576
      %v1923 = vld [vmem:[%s1922] sm:$0xf]
      %v1924 = vld [vmem:[%s1922 + $0x4] sm:$0xf]
      %v1925 = vld [vmem:[%s1922 + $0x8] sm:$0xf]
      %v1926 = vld [vmem:[%s1922 + $0xc] sm:$0xf]
      %v1927 = vld [vmem:[%s1922 + $0x10] sm:$0xf]
      %v1928 = vld [vmem:[%s1922 + $0x14] sm:$0xf]
      %v1929 = vld [vmem:[%s1922 + $0x18] sm:$0xf]
      %v1930 = vld [vmem:[%s1922 + $0x1c] sm:$0xf]
      %v1931 = vld [vmem:[%s1922 + $0x20] sm:$0xf]
      %v1932 = vld [vmem:[%s1922 + $0x24] sm:$0xf]
      %v1933 = vld [vmem:[%s1922 + $0x28] sm:$0xf]
      %v1934 = vld [vmem:[%s1922 + $0x2c] sm:$0xf]
      %v1935 = vld [vmem:[%s1922 + $0x30] sm:$0xf]
      %v1936 = vld [vmem:[%s1922 + $0x34] sm:$0xf]
      %v1937 = vld [vmem:[%s1922 + $0x38] sm:$0xf]
      %v1938 = vld [vmem:[%s1922 + $0x3c] sm:$0xf]
      %v1939 = vld [vmem:[%s1922 + $0x40] sm:$0xf]
      %v1940 = vld [vmem:[%s1922 + $0x44] sm:$0xf]
      %v1941 = vld [vmem:[%s1922 + $0x48] sm:$0xf]
      %v1942 = vld [vmem:[%s1922 + $0x4c] sm:$0xf]
      %v1943 = vld [vmem:[%s1922 + $0x50] sm:$0xf]
      %v1944 = vld [vmem:[%s1922 + $0x54] sm:$0xf]
      %v1945 = vld [vmem:[%s1922 + $0x58] sm:$0xf]
      %v1946 = vld [vmem:[%s1922 + $0x5c] sm:$0xf]
      %v1947 = vld [vmem:[%s1922 + $0x60] sm:$0xf]
      %v1948 = vld [vmem:[%s1922 + $0x64] sm:$0xf]
      %v1949 = vld [vmem:[%s1922 + $0x68] sm:$0xf]
      %v1950 = vld [vmem:[%s1922 + $0x6c] sm:$0xf]
      %v1951 = vld [vmem:[%s1922 + $0x70] sm:$0xf]
      %v1952 = vld [vmem:[%s1922 + $0x74] sm:$0xf]
      %v1953 = vld [vmem:[%s1922 + $0x78] sm:$0xf]
      %v1954 = vld [vmem:[%s1922 + $0x7c] sm:$0xf]
      %v1955 = vld [vmem:[%s1922 + $0x80] sm:$0xf]
      %v1956 = vld [vmem:[%s1922 + $0x84] sm:$0xf]
      %v1957 = vld [vmem:[%s1922 + $0x88] sm:$0xf]
      %v1958 = vld [vmem:[%s1922 + $0x8c] sm:$0xf]
      %v1959 = vld [vmem:[%s1922 + $0x90] sm:$0xf]
      %v1960 = vld [vmem:[%s1922 + $0x94] sm:$0xf]
      %v1961 = vld [vmem:[%s1922 + $0x98] sm:$0xf]
      %v1962 = vld [vmem:[%s1922 + $0x9c] sm:$0xf]
      %v1963 = vld [vmem:[%s1922 + $0xa0] sm:$0xf]
      %v1964 = vld [vmem:[%s1922 + $0xa4] sm:$0xf]
      %v1965 = vld [vmem:[%s1922 + $0xa8] sm:$0xf]
      %v1966 = vld [vmem:[%s1922 + $0xac] sm:$0xf]
      %v1967 = vld [vmem:[%s1922 + $0xb0] sm:$0xf]
      %v1968 = vld [vmem:[%s1922 + $0xb4] sm:$0xf]
      %v1969 = vld [vmem:[%s1922 + $0xb8] sm:$0xf]
      %v1970 = vld [vmem:[%s1922 + $0xbc] sm:$0xf]
      %v1971 = vld [vmem:[%s5 + $0x4] sm:$0x1]
      %v1977 = vrot.slane %v1917, 7
      %v1978 = vrot.slane %v1918, 7
      %v1979 = vsel %vm347, %v1977, %v1978
      %v1980 = vrot.slane %v1919, 7
      %v1981 = vsel %vm347, %v1978, %v1980
      %v1982 = vrot.slane %v1920, 7
      %v1983 = vsel %vm347, %v1980, %v1982
      %v1984 = vrot.slane %v1921, 7
      %v1985 = vsel %vm347, %v1982, %v1984
      %v1991 = vsel %vm347, 0.0, %v1977
      %v1992 = vrot.slane %v1917, 1
      %v1993 = vrot.slane %v1918, 1
      %v1994 = vsel %vm410, %v1992, %v1993
      %v1995 = vrot.slane %v1919, 1
      %v1996 = vsel %vm410, %v1993, %v1995
      %v1997 = vrot.slane %v1920, 1
      %v1998 = vsel %vm410, %v1995, %v1997
      %v1999 = vrot.slane %v1921, 1
      %v2000 = vsel %vm410, %v1997, %v1999
      %v2006 = vsel %vm355, %v1999, 0.0
      %v2007 = vpack.c.bf16 %v1979, %v1991
      %v2008 = vpack.c.bf16 %v1918, %v1917
      %v2009 = vpack.c.bf16 %v1996, %v1994
      %v2010 = vpack.c.bf16 %v1983, %v1981
      %v2011 = vpack.c.bf16 %v1920, %v1919
      %v2012 = vpack.c.bf16 %v2000, %v1998
      %v2013 = vpack.c.bf16 %v1985, %v1985
      %v2014 = vpack.c.bf16 %v1921, %v1921
      %v2015 = vpack.c.bf16 %v2006, %v2006
      %v2016 = vlaneseq
      %v2017 = vshrl.u32 %v2016, 7
      %v2018 = vsub.s32 0, %v2017
      %v2019 = vrot.slane %v1971, %v2018
      %v2068 = vunpack.c.l.b16 %v1923
      %v2069 = vunpack.c.l.b16 %v1924
      %v2070 = vunpack.c.l.b16 %v1925
      %v2071 = vunpack.c.l.b16 %v1926
      %v2072 = vunpack.c.l.b16 %v1927
      %v2073 = vunpack.c.l.b16 %v1928
      %v2074 = vunpack.c.l.b16 %v1929
      %v2075 = vunpack.c.l.b16 %v1930
      %v2076 = vunpack.c.l.b16 %v1931
      %v2077 = vunpack.c.l.b16 %v1932
      %v2078 = vunpack.c.l.b16 %v1933
      %v2079 = vunpack.c.l.b16 %v1934
      %v2080 = vunpack.c.l.b16 %v1935
      %v2081 = vunpack.c.l.b16 %v1936
      %v2082 = vunpack.c.l.b16 %v1937
      %v2083 = vunpack.c.l.b16 %v1938
      %v2084 = vunpack.c.l.b16 %v1939
      %v2085 = vunpack.c.l.b16 %v1940
      %v2086 = vunpack.c.l.b16 %v1941
      %v2087 = vunpack.c.l.b16 %v1942
      %v2088 = vunpack.c.l.b16 %v1943
      %v2089 = vunpack.c.l.b16 %v1944
      %v2090 = vunpack.c.l.b16 %v1945
      %v2091 = vunpack.c.l.b16 %v1946
      %v2092 = vunpack.c.l.b16 %v1947
      %v2093 = vunpack.c.l.b16 %v1948
      %v2094 = vunpack.c.l.b16 %v1949
      %v2095 = vunpack.c.l.b16 %v1950
      %v2096 = vunpack.c.l.b16 %v1951
      %v2097 = vunpack.c.l.b16 %v1952
      %v2098 = vunpack.c.l.b16 %v1953
      %v2099 = vunpack.c.l.b16 %v1954
      %v2100 = vunpack.c.l.b16 %v1955
      %v2101 = vunpack.c.l.b16 %v1956
      %v2102 = vunpack.c.l.b16 %v1957
      %v2103 = vunpack.c.l.b16 %v1958
      %v2104 = vunpack.c.l.b16 %v1959
      %v2105 = vunpack.c.l.b16 %v1960
      %v2106 = vunpack.c.l.b16 %v1961
      %v2107 = vunpack.c.l.b16 %v1962
      %v2108 = vunpack.c.l.b16 %v1963
      %v2109 = vunpack.c.l.b16 %v1964
      %v2110 = vunpack.c.l.b16 %v1965
      %v2111 = vunpack.c.l.b16 %v1966
      %v2112 = vunpack.c.l.b16 %v1967
      %v2113 = vunpack.c.l.b16 %v1968
      %v2114 = vunpack.c.l.b16 %v1969
      %v2115 = vunpack.c.l.b16 %v1970
      %v2116 = vpack.c.b16 %v2069, %v2068
      %v2117 = vpack.c.b16 %v2071, %v2070
      %v2118 = vpack.c.b16 %v2073, %v2072
      %v2119 = vpack.c.b16 %v2075, %v2074
      %v2120 = vpack.c.b16 %v2077, %v2076
      %v2121 = vpack.c.b16 %v2079, %v2078
      %v2122 = vpack.c.b16 %v2081, %v2080
      %v2123 = vpack.c.b16 %v2083, %v2082
      %v2124 = vpack.c.b16 %v2085, %v2084
      %v2125 = vpack.c.b16 %v2087, %v2086
      %v2126 = vpack.c.b16 %v2089, %v2088
      %v2127 = vpack.c.b16 %v2091, %v2090
      %v2128 = vpack.c.b16 %v2093, %v2092
      %v2129 = vpack.c.b16 %v2095, %v2094
      %v2130 = vpack.c.b16 %v2097, %v2096
      %v2131 = vpack.c.b16 %v2099, %v2098
      %v2132 = vpack.c.b16 %v2101, %v2100
      %v2133 = vpack.c.b16 %v2103, %v2102
      %v2134 = vpack.c.b16 %v2105, %v2104
      %v2135 = vpack.c.b16 %v2107, %v2106
      %v2136 = vpack.c.b16 %v2109, %v2108
      %v2137 = vpack.c.b16 %v2111, %v2110
      %v2138 = vpack.c.b16 %v2113, %v2112
      %v2139 = vpack.c.b16 %v2115, %v2114
      %2164 = vmatprep.subr.bf16.mxu0 0
      %2165 = vmatpush1.bf16.msra.mxu0 %v2116
      %2166 = vmatprep.subr.bf16.mxu0 0
      %2167 = vmatpush1.bf16.msra.mxu0 %v2117
      %2168 = vmatprep.subr.bf16.mxu0 0
      %2169 = vmatpush1.bf16.msra.mxu0 %v2118
      %2170 = vmatprep.subr.bf16.mxu0 0
      %2171 = vmatpush1.bf16.msra.mxu0 %v2119
      %2172 = vmatprep.subr.bf16.mxu0 0
      %2173 = vmatpush1.bf16.msra.mxu0 %v2120
      %2174 = vmatprep.subr.bf16.mxu0 0
      %2175 = vmatpush1.bf16.msra.mxu0 %v2121
      %2176 = vmatprep.subr.bf16.mxu0 0
      %2177 = vmatpush1.bf16.msra.mxu0 %v2122
      %2178 = vmatprep.subr.bf16.mxu0 0
      %2179 = vmatpush1.bf16.msra.mxu0 %v2123
      %2180 = vmatprep.subr.bf16.mxu0 0
      %2181 = vmatpush1.bf16.msra.mxu0 %v2124
      %2182 = vmatprep.subr.bf16.mxu0 0
      %2183 = vmatpush1.bf16.msra.mxu0 %v2125
      %2184 = vmatprep.subr.bf16.mxu0 0
      %2185 = vmatpush1.bf16.msra.mxu0 %v2126
      %2186 = vmatprep.subr.bf16.mxu0 0
      %2187 = vmatpush1.bf16.msra.mxu0 %v2127
      %2188 = vmatprep.subr.bf16.mxu0 0
      %2189 = vmatpush1.bf16.msra.mxu0 %v2128
      %2190 = vmatprep.subr.bf16.mxu0 0
      %2191 = vmatpush1.bf16.msra.mxu0 %v2129
      %2192 = vmatprep.subr.bf16.mxu0 0
      %2193 = vmatpush1.bf16.msra.mxu0 %v2130
      %2194 = vmatprep.subr.bf16.mxu0 0
      %2195 = vmatpush1.bf16.msra.mxu0 %v2131
      %2196 = vmatprep.mubr.bf16.mxu0 %v2008
      %2197 = vmatmul.mubr.bf16.gmra.mrb[0].mxu0 %v2007
      %v2198 = vpop.f32.mrb[0].mxu0
      %v2199 = vadd.f32 %v2019, %v2198
      %v2200 = vpop.f32.mrb[0].mxu0
      %v2201 = vpop.f32.mrb[0].mxu0
      %v2202 = vadd.f32 %v2019, %v2201
      %v2203 = vpop.f32.mrb[0].mxu0
      %2204 = vmatprep.mubr.bf16.mxu0 %v2011
      %2205 = vmatmul.mubr.bf16.gmra.mrb[0].mxu0 %v2010
      %v2206 = vpop.f32.mrb[0].mxu0
      %v2207 = vadd.f32 %v2019, %v2206
      %v2208 = vpop.f32.mrb[0].mxu0
      %v2209 = vpop.f32.mrb[0].mxu0
      %v2210 = vadd.f32 %v2019, %v2209
      %v2211 = vpop.f32.mrb[0].mxu0
      %2212 = vmatprep.mubr.bf16.mxu0 %v2014
      %2213 = vmatmul.mubr.bf16.gmra.mrb[0].mxu0 %v2013
      %v2214 = vpop.f32.mrb[0].mxu0
      %v2215 = vadd.f32 %v2019, %v2214
      %v2216 = vpop.f32.mrb[0].mxu0
      %v2217 = vpop.f32.mrb[0].mxu0
      %v2218 = vpop.f32.mrb[0].mxu0
      %2219 = vdwg.mxu0
      %2220 = vmatprep.subr.bf16.mxu0 0
      %2221 = vmatpush1.bf16.msra.mxu0 %v2132
      %2222 = vmatprep.subr.bf16.mxu0 0
      %2223 = vmatpush1.bf16.msra.mxu0 %v2133
      %2224 = vmatprep.subr.bf16.mxu0 0
      %2225 = vmatpush1.bf16.msra.mxu0 %v2134
      %2226 = vmatprep.subr.bf16.mxu0 0
      %2227 = vmatpush1.bf16.msra.mxu0 %v2135
      %2228 = vmatprep.subr.bf16.mxu0 0
      %2229 = vmatpush1.bf16.msra.mxu0 %v2136
      %2230 = vmatprep.subr.bf16.mxu0 0
      %2231 = vmatpush1.bf16.msra.mxu0 %v2137
      %2232 = vmatprep.subr.bf16.mxu0 0
      %2233 = vmatpush1.bf16.msra.mxu0 %v2138
      %2234 = vmatprep.subr.bf16.mxu0 0
      %2235 = vmatpush1.bf16.msra.mxu0 %v2139
      %2236 = vmatprep.subr.bf16.mxu0 0
      %2237 = vmatpush1.bf16.msra.mxu0 0
      %2238 = vmatprep.subr.bf16.mxu0 0
      %2239 = vmatpush1.bf16.msra.mxu0 0
      %2240 = vmatprep.subr.bf16.mxu0 0
      %2241 = vmatpush1.bf16.msra.mxu0 0
      %2242 = vmatprep.subr.bf16.mxu0 0
      %2243 = vmatpush1.bf16.msra.mxu0 0
      %2244 = vmatprep.subr.bf16.mxu0 0
      %2245 = vmatpush1.bf16.msra.mxu0 0
      %2246 = vmatprep.subr.bf16.mxu0 0
      %2247 = vmatpush1.bf16.msra.mxu0 0
      %2248 = vmatprep.subr.bf16.mxu0 0
      %2249 = vmatpush1.bf16.msra.mxu0 0
      %2250 = vmatprep.subr.bf16.mxu0 0
      %2251 = vmatpush1.bf16.msra.mxu0 0
      %2252 = vmatprep.mubr.bf16.mxu0 0
      %2253 = vmatmul.mubr.bf16.gmra.mrb[0].mxu0 %v2009
      %v2254 = vpop.f32.mrb[0].mxu0
      %v2255 = vadd.f32 %v2199, %v2254
      %v2256 = vpop.f32.mrb[0].mxu0
      %v2257 = vpop.f32.mrb[0].mxu0
      %v2258 = vadd.f32 %v2202, %v2257
      %v2259 = vpop.f32.mrb[0].mxu0
      %2260 = vmatprep.mubr.bf16.mxu0 0
      %2261 = vmatmul.mubr.bf16.gmra.mrb[0].mxu0 %v2012
      %v2262 = vpop.f32.mrb[0].mxu0
      %v2263 = vadd.f32 %v2207, %v2262
      %v2264 = vpop.f32.mrb[0].mxu0
      %v2265 = vpop.f32.mrb[0].mxu0
      %v2266 = vadd.f32 %v2210, %v2265
      %v2267 = vpop.f32.mrb[0].mxu0
      %2268 = vmatprep.mubr.bf16.mxu0 0
      %2269 = vmatmul.mubr.bf16.gmra.mrb[0].mxu0 %v2015
      %v2270 = vpop.f32.mrb[0].mxu0
      %v2271 = vadd.f32 %v2215, %v2270
      %v2272 = vpop.f32.mrb[0].mxu0
      %v2273 = vpop.f32.mrb[0].mxu0
      %v2274 = vpop.f32.mrb[0].mxu0
      %2275 = vdwg.mxu0
      %v2276 = vadd.f32 %v1543, %v2255
      %v2277 = vadd.f32 %v1544, %v2258
      %v2278 = vadd.f32 %v1545, %v2263
      %v2279 = vadd.f32 %v1546, %v2266
      %v2280 = vadd.f32 %v1547, %v2271
      %2281 = vst [vmem:[%s329 - $0x1] sm:$0xfe] %v2276
      %2282 = vst [vmem:[%s329 + $0x7] sm:$0xff] %v2277
      %2283 = vst [vmem:[%s329 + $0xf] sm:$0x1] %v2278
      %2284 = vst [vmem:[%s329 + $0xd] sm:$0xf8] %v2278
      %2285 = vst [vmem:[%s329 + $0x15] sm:$0xff] %v2279
      %2286 = vst [vmem:[%s329 + $0x1d] sm:$0x7] %v2280
      %s2287 = smul.u32 4, %s19
      %p2288 = scmp.lt.s32.totalorder %s2287, 7
      %s2289 = scalar_select %p2288, %s2287, 7
      %s2290 = smul.addr %s2289, 8
      %s2291 = scalar_lea.vmem %s8, %s2290
      // Predicated region
      $region53: #{refine_forward.1} parent=51 // pred_check
        %p2292 = pneg %p215
      $region54: #{refine_forward.1} parent=51 // pred_check_branch
        %2294 = sbr.rel (%p2292) target = $region56
      $region55: #{refine_forward.1} parent=51 // pred_region
        %s2295 = smul.u32 4, %s19
      $region56: #{refine_forward.1} parent=51 // pred_fallthru
        _
    $region52: #{refine_forward.1} parent=5 // pred_fallthru
      _
    %p2296 = scmp.le.s32.totalorder 2, %s14
    // Predicated region
    $region57: #{refine_forward.1} parent=5 // pred_check
      %p2297 = pneg %p2296
    $region58: #{refine_forward.1} parent=5 // pred_check_branch
      %2299 = sbr.rel (%p2297) target = $region60
    $region59: #{refine_forward.1} parent=5 // pred_region
      %s2300 = ssub.s32 %s14, 2
      // Predicated region
      $region61: #{refine_forward.1} parent=59 // pred_check
        %p2301 = pneg %p221
      $region62: #{refine_forward.1} parent=59 // pred_check_branch
        %2303 = sbr.rel (%p2301) target = $region64
      $region63: #{refine_forward.1} parent=59 // pred_region
        %s2304 = smul.u32 4, %s20
        %p2305 = scmp.lt.s32.totalorder %s2304, 7
        %s2306 = scalar_select %p2305, %s2304, 7
        %s2307 = smul.addr %s2306, 8
        %s2308 = scalar_lea.vmem %s8, %s2307
      $region64: #{refine_forward.1} parent=59 // pred_fallthru
        _
    $region60: #{refine_forward.1} parent=5 // pred_fallthru
      _
  $region6: #{refine_forward.1} parent=0 // loop_footer
    %s18 = sadd.s32 1, %s14
  $region7: #{refine_forward.1} parent=0 // loop_footer_branch
    %13 = sbr.rel target = $region3
  $region8: #{refine_forward.1} parent=0 // loop_exit
    _

</llo_original>
